<compile_context>
chip_gen: v7x
topology: tpu7x:2x2x1
jax: 0.10.0
libtpu: 0.0.40
codegen_flags: <defaults>
</compile_context>

<pallas_src>
import functools

import jax
import jax.numpy as jnp
import numpy as np
from jax.experimental import pallas as pl
from jax.experimental.pallas import tpu as pltpu  # noqa: F401  (TPU-specific tuning hooks)


# ---------------------------------------------------------------------------
# Fused kernel: GRU recurrence + MLP + merged heads + y = a*z + b
# ---------------------------------------------------------------------------
def nfdiag_fused_kernel(x_ref, zrep_ref, wih_ref, whh_ref, bgi_ref, bhn_ref,
                        w1_ref, b1_ref, w2_ref, b2_ref, wab_ref, bab_ref,
                        out_ref):
    TB = x_ref.shape[0]               # T * Bp rows of x
    Bp, nyk = zrep_ref.shape          # padded batch, ny*nk
    T = TB // Bp
    H = whh_ref.shape[0]              # nh_rnn
    bf16 = jnp.bfloat16
    f32 = jnp.float32

    # --- GRU ---------------------------------------------------------------
    # Input projection hoisted out of the recurrence: one big (T*Bp, 3H)
    # matmul instead of T tiny ones. bgi already contains b_ih plus the
    # (purely additive) r/z halves of b_hh, folded at init time.
    gi_all = jnp.dot(x_ref[...], wih_ref[...],
                     preferred_element_type=f32) + bgi_ref[...]

    whh = whh_ref[...]                # bf16 (H, 3H), resident across the loop
    bhn = bhn_ref[...]                # (1, H) f32, n-gate hidden bias (r-gated)
    h = jnp.zeros((Bp, H), f32)

    # T is small & static -> fully unrolled recurrence; only h @ W_hh sits on
    # the serial critical path now.
    # TODO(synk): for T >> 16 switch to lax.fori_loop + VMEM scratch for gi_all
    # to bound live ranges (and consider pltpu.matmul_push_rhs residency).
    for t in range(T):
        gi = gi_all[t * Bp:(t + 1) * Bp, :]          # static, sublane-aligned
        gh = jnp.dot(h.astype(bf16), whh, preferred_element_type=f32)
        # PyTorch GRUCell gate math (r, z, n ordering); r/z biases pre-folded.
        r = jax.nn.sigmoid(gi[:, 0:H] + gh[:, 0:H])
        zg = jax.nn.sigmoid(gi[:, H:2 * H] + gh[:, H:2 * H])
        n = jnp.tanh(gi[:, 2 * H:] + r * (gh[:, 2 * H:] + bhn))
        h = (1.0 - zg) * n + zg * h

    # --- MLP (2x Linear + tanh) ----------------------------------------------
    h1 = jnp.tanh(jnp.dot(h.astype(bf16), w1_ref[...],
                          preferred_element_type=f32) + b1_ref[...])
    h2 = jnp.tanh(jnp.dot(h1.astype(bf16), w2_ref[...],
                          preferred_element_type=f32) + b2_ref[...])

    # --- merged heads [head_A | head_b]: one 128-lane-wide matmul -------------
    ab = jnp.dot(h2.astype(bf16), wab_ref[...],
                 preferred_element_type=f32) + bab_ref[...]
    a = ab[:, :nyk]
    b = ab[:, nyk:]

    # single merged output slab [a | b | y]; the ab half (2*nyk lanes) is a
    # lane-dense unmasked store, and there is only one output writeback.
    out_ref[:, :2 * nyk] = ab
    out_ref[:, 2 * nyk:] = a * zrep_ref[...] + b


# ---------------------------------------------------------------------------
# NFDiag forward wrapper
# ---------------------------------------------------------------------------
@functools.partial(jax.jit, static_argnames=("nk", "ny"))
def nfdiag_forward(x, z, params, nk, ny):
    """x: (T, B, nx), z: (B, ny). Returns (y, a, b), each (B*nk, ny)."""
    T, B, nx = x.shape
    # Pad batch to a full f32 sublane group (8 rows) so vector ops are unmasked.
    Bp = ((B + 7) // 8) * 8
    pad = Bp - B
    if pad:
        x = jnp.pad(x, ((0, 0), (0, pad), (0, 0)))
        z = jnp.pad(z, ((0, pad), (0, 0)))
    x2d = x.reshape(T * Bp, nx).astype(jnp.bfloat16)
    # Pre-tile z so the kernel epilogue is pure VPU FMA:
    # z_rep[b, k*ny + j] = z[b, j] (matches repeat_interleave(nk, 0) after the
    # final (B*nk, ny) reshape below).
    z_rep = jnp.tile(z, (1, nk))

    nyk = ny * nk
    out = pl.pallas_call(
        nfdiag_fused_kernel,
        out_shape=jax.ShapeDtypeStruct((Bp, 3 * nyk), jnp.float32),
    )(x2d, z_rep,
      params["wih"], params["whh"], params["b_gi"], params["b_hn"],
      params["w1"], params["b1"], params["w2"], params["b2"],
      params["wab"], params["bab"])

    a = out[:B, :nyk].reshape(B * nk, ny)
    b = out[:B, nyk:2 * nyk].reshape(B * nk, ny)
    y = out[:B, 2 * nyk:].reshape(B * nk, ny)
    return y, a, b


# ---------------------------------------------------------------------------
# Pure-JAX reference (same math: bf16 matmul inputs, f32 accumulation)
# ---------------------------------------------------------------------------
def nfdiag_reference(x, z, params, nk, ny):
    T, B, nx = x.shape
    H = params["whh"].shape[0]
    bf16 = jnp.bfloat16
    f32 = jnp.float32
    h = jnp.zeros((B, H), f32)
    for t in range(T):
        gi = jnp.dot(x[t].astype(bf16), params["wih"],
                     preferred_element_type=f32) + params["bih"]
        gh = jnp.dot(h.astype(bf16), params["whh"],
                     preferred_element_type=f32) + params["bhh"]
        r = jax.nn.sigmoid(gi[:, :H] + gh[:, :H])
        zg = jax.nn.sigmoid(gi[:, H:2 * H] + gh[:, H:2 * H])
        n = jnp.tanh(gi[:, 2 * H:] + r * gh[:, 2 * H:])
        h = (1.0 - zg) * n + zg * h
    hh = jnp.tanh(jnp.dot(h.astype(bf16), params["w1"],
                          preferred_element_type=f32) + params["b1"])
    hh = jnp.tanh(jnp.dot(hh.astype(bf16), params["w2"],
                          preferred_element_type=f32) + params["b2"])
    ab = jnp.dot(hh.astype(bf16), params["wab"],
                 preferred_element_type=f32) + params["bab"]
    nyk = ny * nk
    a = ab[:, :nyk].reshape(B * nk, ny)
    b = ab[:, nyk:].reshape(B * nk, ny)
    z_ri = jnp.repeat(z, nk, axis=0)
    y = a * z_ri + b
    return y, a, b


# ---------------------------------------------------------------------------
def init_params(key, nx, ny, nk, nh_rnn, nh_mlp):
    """PyTorch-style uniform(-1/sqrt(fan), 1/sqrt(fan)) init + kernel-time prep
    (bf16 weight casts, bias folding, head concatenation) done ONCE here so the
    per-call path has no parameter re-packing."""
    def lin(k, fan_in, shape):
        bound = 1.0 / np.sqrt(fan_in)
        return jax.random.uniform(k, shape, jnp.float32, -bound, bound)

    ks = jax.random.split(key, 12)
    nh1, nh2 = nh_mlp
    H = nh_rnn
    # GRUCell uses bound 1/sqrt(hidden_size) for all of its params.
    wih = lin(ks[0], H, (nx, 3 * H))
    whh = lin(ks[1], H, (H, 3 * H))
    bih = lin(ks[2], H, (1, 3 * H))
    bhh = lin(ks[3], H, (1, 3 * H))
    w1 = lin(ks[4], H, (H, nh1))
    b1 = lin(ks[5], H, (1, nh1))
    w2 = lin(ks[6], nh1, (nh1, nh2))
    b2 = lin(ks[7], nh1, (1, nh2))
    wa = lin(ks[8], nh2, (nh2, ny * nk))
    ba = lin(ks[9], nh2, (1, ny * nk))
    wb = lin(ks[10], nh2, (nh2, ny * nk))
    bb = lin(ks[11], nh2, (1, ny * nk))

    bf16 = jnp.bfloat16
    # r/z halves of b_hh are purely additive -> fold into the input-projection
    # bias; only the n-gate hidden bias (gated by r) stays in the recurrence.
    b_gi = bih + jnp.concatenate(
        [bhh[:, :2 * H], jnp.zeros((1, H), jnp.float32)], axis=1)
    b_hn = bhh[:, 2 * H:]
    # heads merged into one lane-dense matmul
    wab = jnp.concatenate([wa, wb], axis=1)
    bab = jnp.concatenate([ba, bb], axis=1)

    return {
        # matmul weights pre-transposed (in, out) and pre-cast to bf16
        "wih": wih.astype(bf16), "whh": whh.astype(bf16),
        "w1": w1.astype(bf16), "w2": w2.astype(bf16), "wab": wab.astype(bf16),
        # biases (f32)
        "bih": bih, "bhh": bhh, "b1": b1, "b2": b2, "bab": bab,
        # kernel-only fused biases
        "b_gi": b_gi, "b_hn": b_hn,
    }


if __name__ == "__main__":
    # NFDiag(nx, ny, nk, specs) with small TPU-friendly specs:
    #   specs = {'nh_mlp': [256, 128], 'nh_rnn': 128, 'rnn_type': 'gru',
    #            'x_birnn': False, 'fix_first': False}
    # TODO(synk): fix_first=True branch and the z=None (torch.randn) sampling
    # path are not implemented; caller supplies z and fix_first defaults False.
    T, B = 8, 4
    nx, ny, nk = 32, 16, 4
    nh_rnn, nh_mlp = 128, (256, 128)

    key = jax.random.PRNGKey(0)
    k_p, k_x, k_z = jax.random.split(key, 3)
    params = init_params(k_p, nx, ny, nk, nh_rnn, nh_mlp)

    x = jax.random.normal(k_x, (T, B, nx), jnp.float32)   # (T, B, nx)
    z = jax.random.normal(k_z, (B, ny), jnp.float32)      # (B, ny)

    y, a, b = nfdiag_forward(x, z, params, nk, ny)
    jax.block_until_ready((y, a, b))

    y_ref, a_ref, b_ref = nfdiag_reference(x, z, params, nk, ny)
    np.testing.assert_allclose(np.asarray(y), np.asarray(y_ref), rtol=1e-4, atol=1e-4)
    np.testing.assert_allclose(np.asarray(a), np.asarray(a_ref), rtol=1e-4, atol=1e-4)
    np.testing.assert_allclose(np.asarray(b), np.asarray(b_ref), rtol=1e-4, atol=1e-4)

    print("KERNEL_OK")
</pallas_src>

<mosaic_0001>
module attributes {stable_mosaic.version = 11 : i64} {
  func.func @nfdiag_fused_kernel(%arg0: memref<64x32xbf16, #tpu.memory_space<vmem>>, %arg1: memref<8x64xf32, #tpu.memory_space<vmem>>, %arg2: memref<32x384xbf16, #tpu.memory_space<vmem>>, %arg3: memref<128x384xbf16, #tpu.memory_space<vmem>>, %arg4: memref<1x384xf32, #tpu.memory_space<vmem>>, %arg5: memref<1x128xf32, #tpu.memory_space<vmem>>, %arg6: memref<128x256xbf16, #tpu.memory_space<vmem>>, %arg7: memref<1x256xf32, #tpu.memory_space<vmem>>, %arg8: memref<256x128xbf16, #tpu.memory_space<vmem>>, %arg9: memref<1x128xf32, #tpu.memory_space<vmem>>, %arg10: memref<128x128xbf16, #tpu.memory_space<vmem>>, %arg11: memref<1x128xf32, #tpu.memory_space<vmem>>, %arg12: memref<8x192xf32, #tpu.memory_space<vmem>>) attributes {dimension_semantics = [], scalar_prefetch = 0 : i64, scratch_operands = 0 : i64, tpu.core_type = #tpu.core_type<tc>} {
    %c0 = arith.constant 0 : index
    %c0_0 = arith.constant 0 : index
    %0 = vector.load %arg0[%c0, %c0_0] : memref<64x32xbf16, #tpu.memory_space<vmem>>, vector<64x32xbf16>
    %c0_1 = arith.constant 0 : index
    %c0_2 = arith.constant 0 : index
    %1 = vector.load %arg2[%c0_1, %c0_2] : memref<32x384xbf16, #tpu.memory_space<vmem>>, vector<32x384xbf16>
    %cst = arith.constant dense<0.000000e+00> : vector<64x384xf32>
    %2 = tpu.matmul %0, %1, %cst {dimension_numbers = #tpu.dot_dimension_numbers<[1], [0], [0], [1], [0, 0, 1, 1], [], []>} : vector<64x32xbf16>, vector<32x384xbf16>, vector<64x384xf32> -> vector<64x384xf32>
    %c0_3 = arith.constant 0 : index
    %c0_4 = arith.constant 0 : index
    %3 = vector.load %arg4[%c0_3, %c0_4] : memref<1x384xf32, #tpu.memory_space<vmem>>, vector<1x384xf32>
    %4 = vector.broadcast %3 : vector<1x384xf32> to vector<64x384xf32>
    %5 = arith.addf %2, %4 : vector<64x384xf32>
    %c0_5 = arith.constant 0 : index
    %c0_6 = arith.constant 0 : index
    %6 = vector.load %arg3[%c0_5, %c0_6] : memref<128x384xbf16, #tpu.memory_space<vmem>>, vector<128x384xbf16>
    %c0_7 = arith.constant 0 : index
    %c0_8 = arith.constant 0 : index
    %7 = vector.load %arg5[%c0_7, %c0_8] : memref<1x128xf32, #tpu.memory_space<vmem>>, vector<1x128xf32>
    %cst_9 = arith.constant 0.000000e+00 : f32
    %8 = vector.broadcast %cst_9 : f32 to vector<8x128xf32>
    %9 = vector.extract_strided_slice %5 {offsets = [0, 0], sizes = [8, 384], strides = [1, 1]} : vector<64x384xf32> to vector<8x384xf32>
    %10 = arith.truncf %8 : vector<8x128xf32> to vector<8x128xbf16>
    %cst_10 = arith.constant dense<0.000000e+00> : vector<8x384xf32>
    %11 = tpu.matmul %10, %6, %cst_10 {dimension_numbers = #tpu.dot_dimension_numbers<[1], [0], [0], [1], [0, 0, 1, 1], [], []>} : vector<8x128xbf16>, vector<128x384xbf16>, vector<8x384xf32> -> vector<8x384xf32>
    %12 = vector.extract_strided_slice %9 {offsets = [0, 0], sizes = [8, 128], strides = [1, 1]} : vector<8x384xf32> to vector<8x128xf32>
    %13 = vector.extract_strided_slice %11 {offsets = [0, 0], sizes = [8, 128], strides = [1, 1]} : vector<8x384xf32> to vector<8x128xf32>
    %14 = arith.addf %12, %13 : vector<8x128xf32>
    %15 = arith.negf %14 : vector<8x128xf32>
    %16 = math.exp %15 : vector<8x128xf32>
    %cst_11 = arith.constant 1.000000e+00 : f32
    %17 = vector.broadcast %cst_11 : f32 to vector<8x128xf32>
    %18 = arith.addf %17, %16 : vector<8x128xf32>
    %19 = arith.divf %17, %18 : vector<8x128xf32>
    %20 = vector.extract_strided_slice %9 {offsets = [0, 128], sizes = [8, 128], strides = [1, 1]} : vector<8x384xf32> to vector<8x128xf32>
    %21 = vector.extract_strided_slice %11 {offsets = [0, 128], sizes = [8, 128], strides = [1, 1]} : vector<8x384xf32> to vector<8x128xf32>
    %22 = arith.addf %20, %21 : vector<8x128xf32>
    %23 = arith.negf %22 : vector<8x128xf32>
    %24 = math.exp %23 : vector<8x128xf32>
    %cst_12 = arith.constant 1.000000e+00 : f32
    %25 = vector.broadcast %cst_12 : f32 to vector<8x128xf32>
    %26 = arith.addf %25, %24 : vector<8x128xf32>
    %27 = arith.divf %25, %26 : vector<8x128xf32>
    %28 = vector.extract_strided_slice %9 {offsets = [0, 256], sizes = [8, 128], strides = [1, 1]} : vector<8x384xf32> to vector<8x128xf32>
    %29 = vector.extract_strided_slice %11 {offsets = [0, 256], sizes = [8, 128], strides = [1, 1]} : vector<8x384xf32> to vector<8x128xf32>
    %30 = vector.broadcast %7 : vector<1x128xf32> to vector<8x128xf32>
    %31 = arith.addf %29, %30 : vector<8x128xf32>
    %32 = arith.mulf %19, %31 : vector<8x128xf32>
    %33 = arith.addf %28, %32 : vector<8x128xf32>
    %34 = math.tanh %33 : vector<8x128xf32>
    %cst_13 = arith.constant 1.000000e+00 : f32
    %35 = vector.broadcast %cst_13 : f32 to vector<8x128xf32>
    %36 = arith.subf %35, %27 : vector<8x128xf32>
    %37 = arith.mulf %36, %34 : vector<8x128xf32>
    %38 = arith.mulf %27, %8 : vector<8x128xf32>
    %39 = arith.addf %37, %38 : vector<8x128xf32>
    %40 = vector.extract_strided_slice %5 {offsets = [8, 0], sizes = [8, 384], strides = [1, 1]} : vector<64x384xf32> to vector<8x384xf32>
    %41 = arith.truncf %39 : vector<8x128xf32> to vector<8x128xbf16>
    %cst_14 = arith.constant dense<0.000000e+00> : vector<8x384xf32>
    %42 = tpu.matmul %41, %6, %cst_14 {dimension_numbers = #tpu.dot_dimension_numbers<[1], [0], [0], [1], [0, 0, 1, 1], [], []>} : vector<8x128xbf16>, vector<128x384xbf16>, vector<8x384xf32> -> vector<8x384xf32>
    %43 = vector.extract_strided_slice %40 {offsets = [0, 0], sizes = [8, 128], strides = [1, 1]} : vector<8x384xf32> to vector<8x128xf32>
    %44 = vector.extract_strided_slice %42 {offsets = [0, 0], sizes = [8, 128], strides = [1, 1]} : vector<8x384xf32> to vector<8x128xf32>
    %45 = arith.addf %43, %44 : vector<8x128xf32>
    %46 = arith.negf %45 : vector<8x128xf32>
    %47 = math.exp %46 : vector<8x128xf32>
    %cst_15 = arith.constant 1.000000e+00 : f32
    %48 = vector.broadcast %cst_15 : f32 to vector<8x128xf32>
    %49 = arith.addf %48, %47 : vector<8x128xf32>
    %50 = arith.divf %48, %49 : vector<8x128xf32>
    %51 = vector.extract_strided_slice %40 {offsets = [0, 128], sizes = [8, 128], strides = [1, 1]} : vector<8x384xf32> to vector<8x128xf32>
    %52 = vector.extract_strided_slice %42 {offsets = [0, 128], sizes = [8, 128], strides = [1, 1]} : vector<8x384xf32> to vector<8x128xf32>
    %53 = arith.addf %51, %52 : vector<8x128xf32>
    %54 = arith.negf %53 : vector<8x128xf32>
    %55 = math.exp %54 : vector<8x128xf32>
    %cst_16 = arith.constant 1.000000e+00 : f32
    %56 = vector.broadcast %cst_16 : f32 to vector<8x128xf32>
    %57 = arith.addf %56, %55 : vector<8x128xf32>
    %58 = arith.divf %56, %57 : vector<8x128xf32>
    %59 = vector.extract_strided_slice %40 {offsets = [0, 256], sizes = [8, 128], strides = [1, 1]} : vector<8x384xf32> to vector<8x128xf32>
    %60 = vector.extract_strided_slice %42 {offsets = [0, 256], sizes = [8, 128], strides = [1, 1]} : vector<8x384xf32> to vector<8x128xf32>
    %61 = vector.broadcast %7 : vector<1x128xf32> to vector<8x128xf32>
    %62 = arith.addf %60, %61 : vector<8x128xf32>
    %63 = arith.mulf %50, %62 : vector<8x128xf32>
    %64 = arith.addf %59, %63 : vector<8x128xf32>
    %65 = math.tanh %64 : vector<8x128xf32>
    %cst_17 = arith.constant 1.000000e+00 : f32
    %66 = vector.broadcast %cst_17 : f32 to vector<8x128xf32>
    %67 = arith.subf %66, %58 : vector<8x128xf32>
    %68 = arith.mulf %67, %65 : vector<8x128xf32>
    %69 = arith.mulf %58, %39 : vector<8x128xf32>
    %70 = arith.addf %68, %69 : vector<8x128xf32>
    %71 = vector.extract_strided_slice %5 {offsets = [16, 0], sizes = [8, 384], strides = [1, 1]} : vector<64x384xf32> to vector<8x384xf32>
    %72 = arith.truncf %70 : vector<8x128xf32> to vector<8x128xbf16>
    %cst_18 = arith.constant dense<0.000000e+00> : vector<8x384xf32>
    %73 = tpu.matmul %72, %6, %cst_18 {dimension_numbers = #tpu.dot_dimension_numbers<[1], [0], [0], [1], [0, 0, 1, 1], [], []>} : vector<8x128xbf16>, vector<128x384xbf16>, vector<8x384xf32> -> vector<8x384xf32>
    %74 = vector.extract_strided_slice %71 {offsets = [0, 0], sizes = [8, 128], strides = [1, 1]} : vector<8x384xf32> to vector<8x128xf32>
    %75 = vector.extract_strided_slice %73 {offsets = [0, 0], sizes = [8, 128], strides = [1, 1]} : vector<8x384xf32> to vector<8x128xf32>
    %76 = arith.addf %74, %75 : vector<8x128xf32>
    %77 = arith.negf %76 : vector<8x128xf32>
    %78 = math.exp %77 : vector<8x128xf32>
    %cst_19 = arith.constant 1.000000e+00 : f32
    %79 = vector.broadcast %cst_19 : f32 to vector<8x128xf32>
    %80 = arith.addf %79, %78 : vector<8x128xf32>
    %81 = arith.divf %79, %80 : vector<8x128xf32>
    %82 = vector.extract_strided_slice %71 {offsets = [0, 128], sizes = [8, 128], strides = [1, 1]} : vector<8x384xf32> to vector<8x128xf32>
    %83 = vector.extract_strided_slice %73 {offsets = [0, 128], sizes = [8, 128], strides = [1, 1]} : vector<8x384xf32> to vector<8x128xf32>
    %84 = arith.addf %82, %83 : vector<8x128xf32>
    %85 = arith.negf %84 : vector<8x128xf32>
    %86 = math.exp %85 : vector<8x128xf32>
    %cst_20 = arith.constant 1.000000e+00 : f32
    %87 = vector.broadcast %cst_20 : f32 to vector<8x128xf32>
    %88 = arith.addf %87, %86 : vector<8x128xf32>
    %89 = arith.divf %87, %88 : vector<8x128xf32>
    %90 = vector.extract_strided_slice %71 {offsets = [0, 256], sizes = [8, 128], strides = [1, 1]} : vector<8x384xf32> to vector<8x128xf32>
    %91 = vector.extract_strided_slice %73 {offsets = [0, 256], sizes = [8, 128], strides = [1, 1]} : vector<8x384xf32> to vector<8x128xf32>
    %92 = vector.broadcast %7 : vector<1x128xf32> to vector<8x128xf32>
    %93 = arith.addf %91, %92 : vector<8x128xf32>
    %94 = arith.mulf %81, %93 : vector<8x128xf32>
    %95 = arith.addf %90, %94 : vector<8x128xf32>
    %96 = math.tanh %95 : vector<8x128xf32>
    %cst_21 = arith.constant 1.000000e+00 : f32
    %97 = vector.broadcast %cst_21 : f32 to vector<8x128xf32>
    %98 = arith.subf %97, %89 : vector<8x128xf32>
    %99 = arith.mulf %98, %96 : vector<8x128xf32>
    %100 = arith.mulf %89, %70 : vector<8x128xf32>
    %101 = arith.addf %99, %100 : vector<8x128xf32>
    %102 = vector.extract_strided_slice %5 {offsets = [24, 0], sizes = [8, 384], strides = [1, 1]} : vector<64x384xf32> to vector<8x384xf32>
    %103 = arith.truncf %101 : vector<8x128xf32> to vector<8x128xbf16>
    %cst_22 = arith.constant dense<0.000000e+00> : vector<8x384xf32>
    %104 = tpu.matmul %103, %6, %cst_22 {dimension_numbers = #tpu.dot_dimension_numbers<[1], [0], [0], [1], [0, 0, 1, 1], [], []>} : vector<8x128xbf16>, vector<128x384xbf16>, vector<8x384xf32> -> vector<8x384xf32>
    %105 = vector.extract_strided_slice %102 {offsets = [0, 0], sizes = [8, 128], strides = [1, 1]} : vector<8x384xf32> to vector<8x128xf32>
    %106 = vector.extract_strided_slice %104 {offsets = [0, 0], sizes = [8, 128], strides = [1, 1]} : vector<8x384xf32> to vector<8x128xf32>
    %107 = arith.addf %105, %106 : vector<8x128xf32>
    %108 = arith.negf %107 : vector<8x128xf32>
    %109 = math.exp %108 : vector<8x128xf32>
    %cst_23 = arith.constant 1.000000e+00 : f32
    %110 = vector.broadcast %cst_23 : f32 to vector<8x128xf32>
    %111 = arith.addf %110, %109 : vector<8x128xf32>
    %112 = arith.divf %110, %111 : vector<8x128xf32>
    %113 = vector.extract_strided_slice %102 {offsets = [0, 128], sizes = [8, 128], strides = [1, 1]} : vector<8x384xf32> to vector<8x128xf32>
    %114 = vector.extract_strided_slice %104 {offsets = [0, 128], sizes = [8, 128], strides = [1, 1]} : vector<8x384xf32> to vector<8x128xf32>
    %115 = arith.addf %113, %114 : vector<8x128xf32>
    %116 = arith.negf %115 : vector<8x128xf32>
    %117 = math.exp %116 : vector<8x128xf32>
    %cst_24 = arith.constant 1.000000e+00 : f32
    %118 = vector.broadcast %cst_24 : f32 to vector<8x128xf32>
    %119 = arith.addf %118, %117 : vector<8x128xf32>
    %120 = arith.divf %118, %119 : vector<8x128xf32>
    %121 = vector.extract_strided_slice %102 {offsets = [0, 256], sizes = [8, 128], strides = [1, 1]} : vector<8x384xf32> to vector<8x128xf32>
    %122 = vector.extract_strided_slice %104 {offsets = [0, 256], sizes = [8, 128], strides = [1, 1]} : vector<8x384xf32> to vector<8x128xf32>
    %123 = vector.broadcast %7 : vector<1x128xf32> to vector<8x128xf32>
    %124 = arith.addf %122, %123 : vector<8x128xf32>
    %125 = arith.mulf %112, %124 : vector<8x128xf32>
    %126 = arith.addf %121, %125 : vector<8x128xf32>
    %127 = math.tanh %126 : vector<8x128xf32>
    %cst_25 = arith.constant 1.000000e+00 : f32
    %128 = vector.broadcast %cst_25 : f32 to vector<8x128xf32>
    %129 = arith.subf %128, %120 : vector<8x128xf32>
    %130 = arith.mulf %129, %127 : vector<8x128xf32>
    %131 = arith.mulf %120, %101 : vector<8x128xf32>
    %132 = arith.addf %130, %131 : vector<8x128xf32>
    %133 = vector.extract_strided_slice %5 {offsets = [32, 0], sizes = [8, 384], strides = [1, 1]} : vector<64x384xf32> to vector<8x384xf32>
    %134 = arith.truncf %132 : vector<8x128xf32> to vector<8x128xbf16>
    %cst_26 = arith.constant dense<0.000000e+00> : vector<8x384xf32>
    %135 = tpu.matmul %134, %6, %cst_26 {dimension_numbers = #tpu.dot_dimension_numbers<[1], [0], [0], [1], [0, 0, 1, 1], [], []>} : vector<8x128xbf16>, vector<128x384xbf16>, vector<8x384xf32> -> vector<8x384xf32>
    %136 = vector.extract_strided_slice %133 {offsets = [0, 0], sizes = [8, 128], strides = [1, 1]} : vector<8x384xf32> to vector<8x128xf32>
    %137 = vector.extract_strided_slice %135 {offsets = [0, 0], sizes = [8, 128], strides = [1, 1]} : vector<8x384xf32> to vector<8x128xf32>
    %138 = arith.addf %136, %137 : vector<8x128xf32>
    %139 = arith.negf %138 : vector<8x128xf32>
    %140 = math.exp %139 : vector<8x128xf32>
    %cst_27 = arith.constant 1.000000e+00 : f32
    %141 = vector.broadcast %cst_27 : f32 to vector<8x128xf32>
    %142 = arith.addf %141, %140 : vector<8x128xf32>
    %143 = arith.divf %141, %142 : vector<8x128xf32>
    %144 = vector.extract_strided_slice %133 {offsets = [0, 128], sizes = [8, 128], strides = [1, 1]} : vector<8x384xf32> to vector<8x128xf32>
    %145 = vector.extract_strided_slice %135 {offsets = [0, 128], sizes = [8, 128], strides = [1, 1]} : vector<8x384xf32> to vector<8x128xf32>
    %146 = arith.addf %144, %145 : vector<8x128xf32>
    %147 = arith.negf %146 : vector<8x128xf32>
    %148 = math.exp %147 : vector<8x128xf32>
    %cst_28 = arith.constant 1.000000e+00 : f32
    %149 = vector.broadcast %cst_28 : f32 to vector<8x128xf32>
    %150 = arith.addf %149, %148 : vector<8x128xf32>
    %151 = arith.divf %149, %150 : vector<8x128xf32>
    %152 = vector.extract_strided_slice %133 {offsets = [0, 256], sizes = [8, 128], strides = [1, 1]} : vector<8x384xf32> to vector<8x128xf32>
    %153 = vector.extract_strided_slice %135 {offsets = [0, 256], sizes = [8, 128], strides = [1, 1]} : vector<8x384xf32> to vector<8x128xf32>
    %154 = vector.broadcast %7 : vector<1x128xf32> to vector<8x128xf32>
    %155 = arith.addf %153, %154 : vector<8x128xf32>
    %156 = arith.mulf %143, %155 : vector<8x128xf32>
    %157 = arith.addf %152, %156 : vector<8x128xf32>
    %158 = math.tanh %157 : vector<8x128xf32>
    %cst_29 = arith.constant 1.000000e+00 : f32
    %159 = vector.broadcast %cst_29 : f32 to vector<8x128xf32>
    %160 = arith.subf %159, %151 : vector<8x128xf32>
    %161 = arith.mulf %160, %158 : vector<8x128xf32>
    %162 = arith.mulf %151, %132 : vector<8x128xf32>
    %163 = arith.addf %161, %162 : vector<8x128xf32>
    %164 = vector.extract_strided_slice %5 {offsets = [40, 0], sizes = [8, 384], strides = [1, 1]} : vector<64x384xf32> to vector<8x384xf32>
    %165 = arith.truncf %163 : vector<8x128xf32> to vector<8x128xbf16>
    %cst_30 = arith.constant dense<0.000000e+00> : vector<8x384xf32>
    %166 = tpu.matmul %165, %6, %cst_30 {dimension_numbers = #tpu.dot_dimension_numbers<[1], [0], [0], [1], [0, 0, 1, 1], [], []>} : vector<8x128xbf16>, vector<128x384xbf16>, vector<8x384xf32> -> vector<8x384xf32>
    %167 = vector.extract_strided_slice %164 {offsets = [0, 0], sizes = [8, 128], strides = [1, 1]} : vector<8x384xf32> to vector<8x128xf32>
    %168 = vector.extract_strided_slice %166 {offsets = [0, 0], sizes = [8, 128], strides = [1, 1]} : vector<8x384xf32> to vector<8x128xf32>
    %169 = arith.addf %167, %168 : vector<8x128xf32>
    %170 = arith.negf %169 : vector<8x128xf32>
    %171 = math.exp %170 : vector<8x128xf32>
    %cst_31 = arith.constant 1.000000e+00 : f32
    %172 = vector.broadcast %cst_31 : f32 to vector<8x128xf32>
    %173 = arith.addf %172, %171 : vector<8x128xf32>
    %174 = arith.divf %172, %173 : vector<8x128xf32>
    %175 = vector.extract_strided_slice %164 {offsets = [0, 128], sizes = [8, 128], strides = [1, 1]} : vector<8x384xf32> to vector<8x128xf32>
    %176 = vector.extract_strided_slice %166 {offsets = [0, 128], sizes = [8, 128], strides = [1, 1]} : vector<8x384xf32> to vector<8x128xf32>
    %177 = arith.addf %175, %176 : vector<8x128xf32>
    %178 = arith.negf %177 : vector<8x128xf32>
    %179 = math.exp %178 : vector<8x128xf32>
    %cst_32 = arith.constant 1.000000e+00 : f32
    %180 = vector.broadcast %cst_32 : f32 to vector<8x128xf32>
    %181 = arith.addf %180, %179 : vector<8x128xf32>
    %182 = arith.divf %180, %181 : vector<8x128xf32>
    %183 = vector.extract_strided_slice %164 {offsets = [0, 256], sizes = [8, 128], strides = [1, 1]} : vector<8x384xf32> to vector<8x128xf32>
    %184 = vector.extract_strided_slice %166 {offsets = [0, 256], sizes = [8, 128], strides = [1, 1]} : vector<8x384xf32> to vector<8x128xf32>
    %185 = vector.broadcast %7 : vector<1x128xf32> to vector<8x128xf32>
    %186 = arith.addf %184, %185 : vector<8x128xf32>
    %187 = arith.mulf %174, %186 : vector<8x128xf32>
    %188 = arith.addf %183, %187 : vector<8x128xf32>
    %189 = math.tanh %188 : vector<8x128xf32>
    %cst_33 = arith.constant 1.000000e+00 : f32
    %190 = vector.broadcast %cst_33 : f32 to vector<8x128xf32>
    %191 = arith.subf %190, %182 : vector<8x128xf32>
    %192 = arith.mulf %191, %189 : vector<8x128xf32>
    %193 = arith.mulf %182, %163 : vector<8x128xf32>
    %194 = arith.addf %192, %193 : vector<8x128xf32>
    %195 = vector.extract_strided_slice %5 {offsets = [48, 0], sizes = [8, 384], strides = [1, 1]} : vector<64x384xf32> to vector<8x384xf32>
    %196 = arith.truncf %194 : vector<8x128xf32> to vector<8x128xbf16>
    %cst_34 = arith.constant dense<0.000000e+00> : vector<8x384xf32>
    %197 = tpu.matmul %196, %6, %cst_34 {dimension_numbers = #tpu.dot_dimension_numbers<[1], [0], [0], [1], [0, 0, 1, 1], [], []>} : vector<8x128xbf16>, vector<128x384xbf16>, vector<8x384xf32> -> vector<8x384xf32>
    %198 = vector.extract_strided_slice %195 {offsets = [0, 0], sizes = [8, 128], strides = [1, 1]} : vector<8x384xf32> to vector<8x128xf32>
    %199 = vector.extract_strided_slice %197 {offsets = [0, 0], sizes = [8, 128], strides = [1, 1]} : vector<8x384xf32> to vector<8x128xf32>
    %200 = arith.addf %198, %199 : vector<8x128xf32>
    %201 = arith.negf %200 : vector<8x128xf32>
    %202 = math.exp %201 : vector<8x128xf32>
    %cst_35 = arith.constant 1.000000e+00 : f32
    %203 = vector.broadcast %cst_35 : f32 to vector<8x128xf32>
    %204 = arith.addf %203, %202 : vector<8x128xf32>
    %205 = arith.divf %203, %204 : vector<8x128xf32>
    %206 = vector.extract_strided_slice %195 {offsets = [0, 128], sizes = [8, 128], strides = [1, 1]} : vector<8x384xf32> to vector<8x128xf32>
    %207 = vector.extract_strided_slice %197 {offsets = [0, 128], sizes = [8, 128], strides = [1, 1]} : vector<8x384xf32> to vector<8x128xf32>
    %208 = arith.addf %206, %207 : vector<8x128xf32>
    %209 = arith.negf %208 : vector<8x128xf32>
    %210 = math.exp %209 : vector<8x128xf32>
    %cst_36 = arith.constant 1.000000e+00 : f32
    %211 = vector.broadcast %cst_36 : f32 to vector<8x128xf32>
    %212 = arith.addf %211, %210 : vector<8x128xf32>
    %213 = arith.divf %211, %212 : vector<8x128xf32>
    %214 = vector.extract_strided_slice %195 {offsets = [0, 256], sizes = [8, 128], strides = [1, 1]} : vector<8x384xf32> to vector<8x128xf32>
    %215 = vector.extract_strided_slice %197 {offsets = [0, 256], sizes = [8, 128], strides = [1, 1]} : vector<8x384xf32> to vector<8x128xf32>
    %216 = vector.broadcast %7 : vector<1x128xf32> to vector<8x128xf32>
    %217 = arith.addf %215, %216 : vector<8x128xf32>
    %218 = arith.mulf %205, %217 : vector<8x128xf32>
    %219 = arith.addf %214, %218 : vector<8x128xf32>
    %220 = math.tanh %219 : vector<8x128xf32>
    %cst_37 = arith.constant 1.000000e+00 : f32
    %221 = vector.broadcast %cst_37 : f32 to vector<8x128xf32>
    %222 = arith.subf %221, %213 : vector<8x128xf32>
    %223 = arith.mulf %222, %220 : vector<8x128xf32>
    %224 = arith.mulf %213, %194 : vector<8x128xf32>
    %225 = arith.addf %223, %224 : vector<8x128xf32>
    %226 = vector.extract_strided_slice %5 {offsets = [56, 0], sizes = [8, 384], strides = [1, 1]} : vector<64x384xf32> to vector<8x384xf32>
    %227 = arith.truncf %225 : vector<8x128xf32> to vector<8x128xbf16>
    %cst_38 = arith.constant dense<0.000000e+00> : vector<8x384xf32>
    %228 = tpu.matmul %227, %6, %cst_38 {dimension_numbers = #tpu.dot_dimension_numbers<[1], [0], [0], [1], [0, 0, 1, 1], [], []>} : vector<8x128xbf16>, vector<128x384xbf16>, vector<8x384xf32> -> vector<8x384xf32>
    %229 = vector.extract_strided_slice %226 {offsets = [0, 0], sizes = [8, 128], strides = [1, 1]} : vector<8x384xf32> to vector<8x128xf32>
    %230 = vector.extract_strided_slice %228 {offsets = [0, 0], sizes = [8, 128], strides = [1, 1]} : vector<8x384xf32> to vector<8x128xf32>
    %231 = arith.addf %229, %230 : vector<8x128xf32>
    %232 = arith.negf %231 : vector<8x128xf32>
    %233 = math.exp %232 : vector<8x128xf32>
    %cst_39 = arith.constant 1.000000e+00 : f32
    %234 = vector.broadcast %cst_39 : f32 to vector<8x128xf32>
    %235 = arith.addf %234, %233 : vector<8x128xf32>
    %236 = arith.divf %234, %235 : vector<8x128xf32>
    %237 = vector.extract_strided_slice %226 {offsets = [0, 128], sizes = [8, 128], strides = [1, 1]} : vector<8x384xf32> to vector<8x128xf32>
    %238 = vector.extract_strided_slice %228 {offsets = [0, 128], sizes = [8, 128], strides = [1, 1]} : vector<8x384xf32> to vector<8x128xf32>
    %239 = arith.addf %237, %238 : vector<8x128xf32>
    %240 = arith.negf %239 : vector<8x128xf32>
    %241 = math.exp %240 : vector<8x128xf32>
    %cst_40 = arith.constant 1.000000e+00 : f32
    %242 = vector.broadcast %cst_40 : f32 to vector<8x128xf32>
    %243 = arith.addf %242, %241 : vector<8x128xf32>
    %244 = arith.divf %242, %243 : vector<8x128xf32>
    %245 = vector.extract_strided_slice %226 {offsets = [0, 256], sizes = [8, 128], strides = [1, 1]} : vector<8x384xf32> to vector<8x128xf32>
    %246 = vector.extract_strided_slice %228 {offsets = [0, 256], sizes = [8, 128], strides = [1, 1]} : vector<8x384xf32> to vector<8x128xf32>
    %247 = vector.broadcast %7 : vector<1x128xf32> to vector<8x128xf32>
    %248 = arith.addf %246, %247 : vector<8x128xf32>
    %249 = arith.mulf %236, %248 : vector<8x128xf32>
    %250 = arith.addf %245, %249 : vector<8x128xf32>
    %251 = math.tanh %250 : vector<8x128xf32>
    %cst_41 = arith.constant 1.000000e+00 : f32
    %252 = vector.broadcast %cst_41 : f32 to vector<8x128xf32>
    %253 = arith.subf %252, %244 : vector<8x128xf32>
    %254 = arith.mulf %253, %251 : vector<8x128xf32>
    %255 = arith.mulf %244, %225 : vector<8x128xf32>
    %256 = arith.addf %254, %255 : vector<8x128xf32>
    %257 = arith.truncf %256 : vector<8x128xf32> to vector<8x128xbf16>
    %c0_42 = arith.constant 0 : index
    %c0_43 = arith.constant 0 : index
    %258 = vector.load %arg6[%c0_42, %c0_43] : memref<128x256xbf16, #tpu.memory_space<vmem>>, vector<128x256xbf16>
    %cst_44 = arith.constant dense<0.000000e+00> : vector<8x256xf32>
    %259 = tpu.matmul %257, %258, %cst_44 {dimension_numbers = #tpu.dot_dimension_numbers<[1], [0], [0], [1], [0, 0, 1, 1], [], []>} : vector<8x128xbf16>, vector<128x256xbf16>, vector<8x256xf32> -> vector<8x256xf32>
    %c0_45 = arith.constant 0 : index
    %c0_46 = arith.constant 0 : index
    %260 = vector.load %arg7[%c0_45, %c0_46] : memref<1x256xf32, #tpu.memory_space<vmem>>, vector<1x256xf32>
    %261 = vector.broadcast %260 : vector<1x256xf32> to vector<8x256xf32>
    %262 = arith.addf %259, %261 : vector<8x256xf32>
    %263 = math.tanh %262 : vector<8x256xf32>
    %264 = arith.truncf %263 : vector<8x256xf32> to vector<8x256xbf16>
    %c0_47 = arith.constant 0 : index
    %c0_48 = arith.constant 0 : index
    %265 = vector.load %arg8[%c0_47, %c0_48] : memref<256x128xbf16, #tpu.memory_space<vmem>>, vector<256x128xbf16>
    %cst_49 = arith.constant dense<0.000000e+00> : vector<8x128xf32>
    %266 = tpu.matmul %264, %265, %cst_49 {dimension_numbers = #tpu.dot_dimension_numbers<[1], [0], [0], [1], [0, 0, 1, 1], [], []>} : vector<8x256xbf16>, vector<256x128xbf16>, vector<8x128xf32> -> vector<8x128xf32>
    %c0_50 = arith.constant 0 : index
    %c0_51 = arith.constant 0 : index
    %267 = vector.load %arg9[%c0_50, %c0_51] : memref<1x128xf32, #tpu.memory_space<vmem>>, vector<1x128xf32>
    %268 = vector.broadcast %267 : vector<1x128xf32> to vector<8x128xf32>
    %269 = arith.addf %266, %268 : vector<8x128xf32>
    %270 = math.tanh %269 : vector<8x128xf32>
    %271 = arith.truncf %270 : vector<8x128xf32> to vector<8x128xbf16>
    %c0_52 = arith.constant 0 : index
    %c0_53 = arith.constant 0 : index
    %272 = vector.load %arg10[%c0_52, %c0_53] : memref<128x128xbf16, #tpu.memory_space<vmem>>, vector<128x128xbf16>
    %cst_54 = arith.constant dense<0.000000e+00> : vector<8x128xf32>
    %273 = tpu.matmul %271, %272, %cst_54 {dimension_numbers = #tpu.dot_dimension_numbers<[1], [0], [0], [1], [0, 0, 1, 1], [], []>} : vector<8x128xbf16>, vector<128x128xbf16>, vector<8x128xf32> -> vector<8x128xf32>
    %c0_55 = arith.constant 0 : index
    %c0_56 = arith.constant 0 : index
    %274 = vector.load %arg11[%c0_55, %c0_56] : memref<1x128xf32, #tpu.memory_space<vmem>>, vector<1x128xf32>
    %275 = vector.broadcast %274 : vector<1x128xf32> to vector<8x128xf32>
    %276 = arith.addf %273, %275 : vector<8x128xf32>
    %277 = vector.extract_strided_slice %276 {offsets = [0, 0], sizes = [8, 64], strides = [1, 1]} : vector<8x128xf32> to vector<8x64xf32>
    %278 = vector.extract_strided_slice %276 {offsets = [0, 64], sizes = [8, 64], strides = [1, 1]} : vector<8x128xf32> to vector<8x64xf32>
    %c0_57 = arith.constant 0 : index
    %c0_58 = arith.constant 0 : index
    %279 = vector.load %arg12[%c0_57, %c0_58] : memref<8x192xf32, #tpu.memory_space<vmem>>, vector<8x128xf32>
    tpu.vector_store %arg12[%c0_57, %c0_58], %276 {strides = array<i32>} : memref<8x192xf32, #tpu.memory_space<vmem>>, vector<8x128xf32>,
    %c0_59 = arith.constant 0 : index
    %c0_60 = arith.constant 0 : index
    %280 = vector.load %arg1[%c0_59, %c0_60] : memref<8x64xf32, #tpu.memory_space<vmem>>, vector<8x64xf32>
    %281 = arith.mulf %277, %280 : vector<8x64xf32>
    %282 = arith.addf %281, %278 : vector<8x64xf32>
    %c0_61 = arith.constant 0 : index
    %c128 = arith.constant 128 : index
    %283 = vector.load %arg12[%c0_61, %c128] : memref<8x192xf32, #tpu.memory_space<vmem>>, vector<8x64xf32>
    tpu.vector_store %arg12[%c0_61, %c128], %282 {strides = array<i32>} : memref<8x192xf32, #tpu.memory_space<vmem>>, vector<8x64xf32>,
    return
  }
}

</mosaic_0001>

<llo_original>
// kernel: tile.9
$region0: #{tile.9}
  %s0 = inlined_call_operand.vmem [shape: f32[8,4,16], index: 0, kind: input, shape index: {}]
  %s1 = inlined_call_operand.vmem [shape: f32[8,64], index: 1, kind: output, shape index: {}]
  $region1: #{tile.9} parent=0
    #allocation0 [shape = 'u8[32768]{0}', space=vmem, size = 0x8000, scoped, tag = 'scoped mem for input reshape']
    %s3 = sshllo.u32 0, 4
    %s4 = smul.addr 4, 7
    %s5 = scalar_lea.vmem %s0, %s4
    %v6 = vld [vmem:[%s5] sm:%s3]
    %s7 = scalar_lea.vmem [#allocation0], 56
    %8 = vst [vmem:[%s7] sm:%s3] %v6
    %s9 = smul.addr 4, 6
    %s10 = scalar_lea.vmem %s0, %s9
    %v11 = vld [vmem:[%s10] sm:%s3]
    %s12 = scalar_lea.vmem [#allocation0], 48
    %13 = vst [vmem:[%s12] sm:%s3] %v11
    %s14 = smul.addr 4, 5
    %s15 = scalar_lea.vmem %s0, %s14
    %v16 = vld [vmem:[%s15] sm:%s3]
    %s17 = scalar_lea.vmem [#allocation0], 40
    %18 = vst [vmem:[%s17] sm:%s3] %v16
    %s19 = smul.addr 4, 4
    %s20 = scalar_lea.vmem %s0, %s19
    %v21 = vld [vmem:[%s20] sm:%s3]
    %s22 = scalar_lea.vmem [#allocation0], 32
    %23 = vst [vmem:[%s22] sm:%s3] %v21
    %s24 = smul.addr 4, 3
    %s25 = scalar_lea.vmem %s0, %s24
    %v26 = vld [vmem:[%s25] sm:%s3]
    %s27 = scalar_lea.vmem [#allocation0], 24
    %28 = vst [vmem:[%s27] sm:%s3] %v26
    %s29 = smul.addr 4, 2
    %s30 = scalar_lea.vmem %s0, %s29
    %v31 = vld [vmem:[%s30] sm:%s3]
    %s32 = scalar_lea.vmem [#allocation0], 16
    %33 = vst [vmem:[%s32] sm:%s3] %v31
    %s34 = scalar_lea.vmem %s0, 4
    %v35 = vld [vmem:[%s34] sm:%s3]
    %s36 = scalar_lea.vmem [#allocation0], 8
    %37 = vst [vmem:[%s36] sm:%s3] %v35
    %v38 = vld [vmem:[%s0] sm:%s3]
    %39 = vst [vmem:[#allocation0] sm:%s3] %v38
    %v40 = vld [vmem:[#allocation0] ss:$8 sm:$0xf]
    %v41 = vld [vmem:[#allocation0] ss:$8 sm:$0xf0]
    %vm42 = vcmask 1047556
    %v43 = vsel %vm42, %v41, %v40
    %vm44 = vcmask 130048
    %45 = vst.msk [vmem:[%s1] sm:$0xff] %vm44, %v43
    %s46 = scalar_lea.vmem [#allocation0], 3
    %v47 = vld [vmem:[%s46] ss:$8 sm:$0xf]
    %s48 = scalar_lea.vmem [#allocation0], 3
    %v49 = vld [vmem:[%s48] ss:$8 sm:$0xf0]
    %vm50 = vcmask 1047556
    %v51 = vsel %vm50, %v49, %v47
    %52 = vrot.lane.b32.xlu0 %v51, 48
    %v53 = vpop.permute.xlu0 %52
    %vm54 = vcmask 523648
    %55 = vst.msk [vmem:[%s1] sm:$0xff] %vm54, %v53
    %s56 = scalar_lea.vmem [#allocation0], 2
    %v57 = vld [vmem:[%s56] ss:$8 sm:$0xf]
    %s58 = scalar_lea.vmem [#allocation0], 2
    %v59 = vld [vmem:[%s58] ss:$8 sm:$0xf0]
    %vm60 = vcmask 1047556
    %v61 = vsel %vm60, %v59, %v57
    %62 = vrot.lane.b32.xlu0 %v61, 32
    %v63 = vpop.permute.xlu0 %62
    %vm64 = vcmask 392448
    %65 = vst.msk [vmem:[%s1] sm:$0xff] %vm64, %v63
    %s66 = scalar_lea.vmem [#allocation0], 1
    %v67 = vld [vmem:[%s66] ss:$8 sm:$0xf]
    %s68 = scalar_lea.vmem [#allocation0], 1
    %v69 = vld [vmem:[%s68] ss:$8 sm:$0xf0]
    %vm70 = vcmask 1047556
    %v71 = vsel %vm70, %v69, %v67
    %72 = vrot.lane.b32.xlu0 %v71, 16
    %v73 = vpop.permute.xlu0 %72
    %vm74 = vcmask 261248
    %75 = vst.msk [vmem:[%s1] sm:$0xff] %vm74, %v73

// kernel: nfdiag_forward.1
$region0: #{nfdiag_forward.1}
  #allocation0 [shape = 'u32[]', space=smem, size = 0x4, offset = 0x4, fixed_abs, tag = 'smem constant byte address 0x4 - core index']
  #allocation1 [shape = 'u32[144,128]{1,0:T(1,128)}', space=vmem, size = 0x12000, scoped, tag = 'internal scratch']
  %s0 = inlined_call_operand.vmem [shape: bf16[64,32], index: 0, kind: input, shape index: {}]
  %s1 = inlined_call_operand.vmem [shape: f32[8,64], index: 1, kind: input, shape index: {}]
  %s2 = inlined_call_operand.hbm [shape: bf16[32,384], index: 2, kind: input, shape index: {}]
  %s3 = inlined_call_operand.vmem [shape: bf16[128,384], index: 3, kind: input, shape index: {}]
  %s4 = inlined_call_operand.vmem [shape: f32[1,384], index: 4, kind: input, shape index: {}]
  %s5 = inlined_call_operand.vmem [shape: f32[1,128], index: 5, kind: input, shape index: {}]
  %s6 = inlined_call_operand.hbm [shape: bf16[128,256], index: 6, kind: input, shape index: {}]
  %s7 = inlined_call_operand.vmem [shape: f32[1,256], index: 7, kind: input, shape index: {}]
  %s8 = inlined_call_operand.hbm [shape: bf16[256,128], index: 8, kind: input, shape index: {}]
  %s9 = inlined_call_operand.vmem [shape: f32[1,128], index: 9, kind: input, shape index: {}]
  %s10 = inlined_call_operand.hbm [shape: bf16[128,128], index: 10, kind: input, shape index: {}]
  %s11 = inlined_call_operand.vmem [shape: f32[1,128], index: 11, kind: input, shape index: {}]
  %s12 = inlined_call_operand.vmem [shape: f32[8,192], index: 12, kind: output, shape index: {}]
  %s13 = sld [smem:[#allocation0]]
  $region74: #{nfdiag_forward.1} parent=0
    _
  %s15 = ssub.s32 1, %s13
  %s16 = scalar_select 0, %s15, %s13
  $region1: #{nfdiag_forward.1} parent=0
    #allocation2 [shape = 'u8[24576]{0}', space=vmem, size = 0x6000, scoped, tag = 'input window, operand 2, single buffered']
    #allocation3 [shape = 's32[1]{0}', space=sflag, size = 0x4, scoped, tag = 'scoped memory for nfdiag_forward.1']
    #allocation4 [shape = 'u8[65536]{0}', space=vmem, size = 0x10000, scoped, tag = 'input window, operand 6, single buffered']
    #allocation5 [shape = 's32[1]{0}', space=sflag, size = 0x4, scoped, tag = 'scoped memory for nfdiag_forward.1']
    #allocation6 [shape = 'u8[65536]{0}', space=vmem, size = 0x10000, scoped, tag = 'input window, operand 8, single buffered']
    #allocation7 [shape = 'u8[32768]{0}', space=vmem, size = 0x8000, scoped, tag = 'input window, operand 10, single buffered']
    #allocation8 [shape = 's32[1]{0}', space=sflag, size = 0x4, scoped, tag = 'scoped memory for nfdiag_forward.1']
    %17 = vsyncpa [#allocation3], 0
    %18 = vsyncpa [#allocation5], 0
    %19 = vsyncpa [#allocation8], 0
    // Predicated region
    $region2: #{nfdiag_forward.1} parent=1 // pred_check
      _
    $region3: #{nfdiag_forward.1} parent=1 // pred_check_branch
      %21 = sbr.rel (0) target = $region5
    $region4: #{nfdiag_forward.1} parent=1 // pred_region
      _
    $region5: #{nfdiag_forward.1} parent=1 // pred_fallthru
      _
    // Predicated region
    $region6: #{nfdiag_forward.1} parent=1 // pred_check
      _
    $region7: #{nfdiag_forward.1} parent=1 // pred_check_branch
      %23 = sbr.rel (0) target = $region9
    $region8: #{nfdiag_forward.1} parent=1 // pred_region
      _
    $region9: #{nfdiag_forward.1} parent=1 // pred_fallthru
      _
    // Predicated region
    $region10: #{nfdiag_forward.1} parent=1 // pred_check
      _
    $region11: #{nfdiag_forward.1} parent=1 // pred_check_branch
      %25 = sbr.rel (0) target = $region13
    $region12: #{nfdiag_forward.1} parent=1 // pred_region
      %s27 = ssub.s32 768, 768
      %28 = vsyncadd [#allocation3], %s27
      %s29 = sshll.u32 [#allocation2], 4
      %s30 = int_to_ptr.vmem [resolvable:$true] %s29
      %35 = dma.hbm_to_vmem [thread:$0]  %s2, 768, %s30, [#allocation3], 192, 192, 12
    $region13: #{nfdiag_forward.1} parent=1 // pred_fallthru
      _
    // Predicated region
    $region14: #{nfdiag_forward.1} parent=1 // pred_check
      _
    $region15: #{nfdiag_forward.1} parent=1 // pred_check_branch
      %37 = sbr.rel (0) target = $region17
    $region16: #{nfdiag_forward.1} parent=1 // pred_region
      _
    $region17: #{nfdiag_forward.1} parent=1 // pred_fallthru
      _
    // Predicated region
    $region18: #{nfdiag_forward.1} parent=1 // pred_check
      _
    $region19: #{nfdiag_forward.1} parent=1 // pred_check_branch
      %39 = sbr.rel (0) target = $region21
    $region20: #{nfdiag_forward.1} parent=1 // pred_region
      _
    $region21: #{nfdiag_forward.1} parent=1 // pred_fallthru
      _
    // Predicated region
    $region22: #{nfdiag_forward.1} parent=1 // pred_check
      _
    $region23: #{nfdiag_forward.1} parent=1 // pred_check_branch
      %41 = sbr.rel (0) target = $region25
    $region24: #{nfdiag_forward.1} parent=1 // pred_region
      _
    $region25: #{nfdiag_forward.1} parent=1 // pred_fallthru
      _
    // Predicated region
    $region26: #{nfdiag_forward.1} parent=1 // pred_check
      _
    $region27: #{nfdiag_forward.1} parent=1 // pred_check_branch
      %43 = sbr.rel (0) target = $region29
    $region28: #{nfdiag_forward.1} parent=1 // pred_region
      %s45 = ssub.s32 2048, 2048
      %46 = vsyncadd [#allocation5], %s45
      %s47 = sshll.u32 [#allocation4], 4
      %s48 = int_to_ptr.vmem [resolvable:$true] %s47
      %53 = dma.hbm_to_vmem [thread:$0]  %s6, 2048, %s48, [#allocation5], 128, 128, 8
    $region29: #{nfdiag_forward.1} parent=1 // pred_fallthru
      _
    // Predicated region
    $region30: #{nfdiag_forward.1} parent=1 // pred_check
      _
    $region31: #{nfdiag_forward.1} parent=1 // pred_check_branch
      %55 = sbr.rel (0) target = $region33
    $region32: #{nfdiag_forward.1} parent=1 // pred_region
      _
    $region33: #{nfdiag_forward.1} parent=1 // pred_fallthru
      _
    // Predicated region
    $region34: #{nfdiag_forward.1} parent=1 // pred_check
      _
    $region35: #{nfdiag_forward.1} parent=1 // pred_check_branch
      %57 = sbr.rel (0) target = $region37
    $region36: #{nfdiag_forward.1} parent=1 // pred_region
      %s59 = ssub.s32 2048, 2048
      %60 = vsyncadd [#allocation5], %s59
      %s61 = sshll.u32 [#allocation6], 4
      %s62 = int_to_ptr.vmem [resolvable:$true] %s61
      %67 = dma.hbm_to_vmem [thread:$0]  %s8, 2048, %s62, [#allocation5], 64, 64, 4
    $region37: #{nfdiag_forward.1} parent=1 // pred_fallthru
      _
    // Predicated region
    $region38: #{nfdiag_forward.1} parent=1 // pred_check
      _
    $region39: #{nfdiag_forward.1} parent=1 // pred_check_branch
      %69 = sbr.rel (0) target = $region41
    $region40: #{nfdiag_forward.1} parent=1 // pred_region
      _
    $region41: #{nfdiag_forward.1} parent=1 // pred_fallthru
      _
    // Predicated region
    $region42: #{nfdiag_forward.1} parent=1 // pred_check
      _
    $region43: #{nfdiag_forward.1} parent=1 // pred_check_branch
      %71 = sbr.rel (0) target = $region45
    $region44: #{nfdiag_forward.1} parent=1 // pred_region
      %s73 = ssub.s32 1024, 1024
      %74 = vsyncadd [#allocation8], %s73
      %s75 = sshll.u32 [#allocation7], 4
      %s76 = int_to_ptr.vmem [resolvable:$true] %s75
      %81 = dma.hbm_to_vmem [thread:$0]  %s10, 1024, %s76, [#allocation8], 64, 64, 4
    $region45: #{nfdiag_forward.1} parent=1 // pred_fallthru
      _
    // Predicated region
    $region46: #{nfdiag_forward.1} parent=1 // pred_check
      _
    $region47: #{nfdiag_forward.1} parent=1 // pred_check_branch
      %83 = sbr.rel (0) target = $region49
    $region48: #{nfdiag_forward.1} parent=1 // pred_region
      _
    $region49: #{nfdiag_forward.1} parent=1 // pred_fallthru
      _
    // Predicated region
    $region50: #{nfdiag_forward.1} parent=1 // pred_check
      _
    $region51: #{nfdiag_forward.1} parent=1 // pred_check_branch
      %85 = sbr.rel (0) target = $region53
    $region52: #{nfdiag_forward.1} parent=1 // pred_region
      %86 = dma.done [#allocation3], 768
    $region53: #{nfdiag_forward.1} parent=1 // pred_fallthru
      _
    // Predicated region
    $region54: #{nfdiag_forward.1} parent=1 // pred_check
      _
    $region55: #{nfdiag_forward.1} parent=1 // pred_check_branch
      %88 = sbr.rel (0) target = $region57
    $region56: #{nfdiag_forward.1} parent=1 // pred_region
      %89 = dma.done [#allocation5], 2048
    $region57: #{nfdiag_forward.1} parent=1 // pred_fallthru
      _
    // Predicated region
    $region58: #{nfdiag_forward.1} parent=1 // pred_check
      _
    $region59: #{nfdiag_forward.1} parent=1 // pred_check_branch
      %91 = sbr.rel (0) target = $region61
    $region60: #{nfdiag_forward.1} parent=1 // pred_region
      %92 = dma.done [#allocation5], 2048
    $region61: #{nfdiag_forward.1} parent=1 // pred_fallthru
      _
    // Predicated region
    $region62: #{nfdiag_forward.1} parent=1 // pred_check
      _
    $region63: #{nfdiag_forward.1} parent=1 // pred_check_branch
      %94 = sbr.rel (0) target = $region65
    $region64: #{nfdiag_forward.1} parent=1 // pred_region
      %95 = dma.done [#allocation8], 1024
    $region65: #{nfdiag_forward.1} parent=1 // pred_fallthru
      _
    %v97 = vld [vmem:[%s0] sm:$0xf]
    %v98 = vld [vmem:[%s0 + $0x4] sm:$0xf]
    %v99 = vld [vmem:[%s0 + $0x8] sm:$0xf]
    %v100 = vld [vmem:[%s0 + $0xc] sm:$0xf]
    %v101 = vld [vmem:[%s0 + $0x10] sm:$0xf]
    %v102 = vld [vmem:[%s0 + $0x14] sm:$0xf]
    %v103 = vld [vmem:[%s0 + $0x18] sm:$0xf]
    %v104 = vld [vmem:[%s0 + $0x1c] sm:$0xf]
    %v105 = vld [vmem:[#allocation2] sm:$0xff]
    %v106 = vld [vmem:[#allocation2 + $0x8] sm:$0xf]
    %v107 = vld [vmem:[#allocation2 + $0xc] sm:$0xff]
    %v108 = vld [vmem:[#allocation2 + $0x14] sm:$0xf]
    %v109 = vld [vmem:[#allocation2 + $0x18] sm:$0xff]
    %v110 = vld [vmem:[#allocation2 + $0x20] sm:$0xf]
    %v111 = vld [vmem:[#allocation2 + $0x24] sm:$0xff]
    %v112 = vld [vmem:[#allocation2 + $0x2c] sm:$0xf]
    %v113 = vld [vmem:[%s4] sm:$0x7]
    %v115 = vlaneseq
    %v116 = vshrl.u32 %v115, 7
    %v117 = vsub.s32 0, %v116
    %v118 = vrot.slane %v113, %v117
    %v119 = vlaneseq
    %v120 = vshrl.u32 %v119, 7
    %v121 = vsub.s32 1, %v120
    %v122 = vrot.slane %v113, %v121
    %v123 = vlaneseq
    %v124 = vshrl.u32 %v123, 7
    %v125 = vsub.s32 2, %v124
    %v126 = vrot.slane %v113, %v125
    %v138 = vunpack.c.l.b16 %v97
    %v139 = vunpack.c.l.b16 %v98
    %v140 = vunpack.c.l.b16 %v99
    %v141 = vunpack.c.l.b16 %v100
    %v142 = vunpack.c.l.b16 %v101
    %v143 = vunpack.c.l.b16 %v102
    %v144 = vunpack.c.l.b16 %v103
    %v145 = vunpack.c.l.b16 %v104
    %v146 = vpack.c.b16 %v139, %v138
    %v147 = vpack.c.b16 %v141, %v140
    %v148 = vpack.c.b16 %v143, %v142
    %v149 = vpack.c.b16 %v145, %v144
    %v158 = vunpack.c.l.b16 %v105
    %v159 = vunpack.c.h.b16 %v105
    %v160 = vunpack.c.l.b16 %v106
    %v161 = vunpack.c.l.b16 %v107
    %v162 = vunpack.c.h.b16 %v107
    %v163 = vunpack.c.l.b16 %v108
    %v164 = vunpack.c.l.b16 %v109
    %v165 = vunpack.c.h.b16 %v109
    %v166 = vunpack.c.l.b16 %v110
    %v167 = vunpack.c.l.b16 %v111
    %v168 = vunpack.c.h.b16 %v111
    %v169 = vunpack.c.l.b16 %v112
    %v170 = vpack.c.b16 %v161, %v158
    %v171 = vpack.c.b16 %v162, %v159
    %v172 = vpack.c.b16 %v163, %v160
    %v173 = vpack.c.b16 %v167, %v164
    %v174 = vpack.c.b16 %v168, %v165
    %v175 = vpack.c.b16 %v169, %v166
    %vm182 = vcmask 261120
    %v184 = vsel %vm182, %v146, 0
    %v187 = vsel %vm182, %v147, 0
    %v190 = vsel %vm182, %v148, 0
    %v193 = vsel %vm182, %v149, 0
    %195 = vmatprep.subr.bf16.mxu0 %v171
    %196 = vmatpush1.bf16.msra.mxu0 %v170
    %197 = vmatprep.subr.bf16.mxu0 %v174
    %198 = vmatpush1.bf16.msra.mxu0 %v173
    %199 = vmatprep.subr.bf16.mxu0 0
    %200 = vmatpush1.bf16.msra.mxu0 0
    %201 = vmatprep.subr.bf16.mxu0 0
    %202 = vmatpush1.bf16.msra.mxu0 0
    %203 = vmatprep.subr.bf16.mxu0 0
    %204 = vmatpush1.bf16.msra.mxu0 0
    %205 = vmatprep.subr.bf16.mxu0 0
    %206 = vmatpush1.bf16.msra.mxu0 0
    %207 = vmatprep.subr.bf16.mxu0 0
    %208 = vmatpush1.bf16.msra.mxu0 0
    %209 = vmatprep.subr.bf16.mxu0 0
    %210 = vmatpush1.bf16.msra.mxu0 0
    %211 = vmatprep.subr.bf16.mxu0 0
    %212 = vmatpush1.bf16.msra.mxu0 0
    %213 = vmatprep.subr.bf16.mxu0 0
    %214 = vmatpush1.bf16.msra.mxu0 0
    %215 = vmatprep.subr.bf16.mxu0 0
    %216 = vmatpush1.bf16.msra.mxu0 0
    %217 = vmatprep.subr.bf16.mxu0 0
    %218 = vmatpush1.bf16.msra.mxu0 0
    %219 = vmatprep.subr.bf16.mxu0 0
    %220 = vmatpush1.bf16.msra.mxu0 0
    %221 = vmatprep.subr.bf16.mxu0 0
    %222 = vmatpush1.bf16.msra.mxu0 0
    %223 = vmatprep.subr.bf16.mxu0 0
    %224 = vmatpush1.bf16.msra.mxu0 0
    %225 = vmatprep.subr.bf16.mxu0 0
    %226 = vmatpush1.bf16.msra.mxu0 0
    %227 = vmatprep.mubr.bf16.mxu0 0
    %228 = vmatmul.mubr.bf16.gmra.mrb[0].mxu0 %v184
    %v229 = vpop.f32.mrb[0].mxu0
    %v230 = vadd.f32 %v118, %v229
    %v231 = vpop.f32.mrb[0].mxu0
    %v232 = vadd.f32 %v122, %v231
    %v233 = vpop.f32.mrb[0].mxu0
    %v234 = vadd.f32 %v118, %v233
    %v235 = vpop.f32.mrb[0].mxu0
    %v236 = vadd.f32 %v122, %v235
    %237 = vmatprep.mubr.bf16.mxu0 0
    %238 = vmatmul.mubr.bf16.gmra.mrb[0].mxu0 %v187
    %v239 = vpop.f32.mrb[0].mxu0
    %v240 = vadd.f32 %v118, %v239
    %v241 = vpop.f32.mrb[0].mxu0
    %v242 = vadd.f32 %v122, %v241
    %v243 = vpop.f32.mrb[0].mxu0
    %v244 = vadd.f32 %v118, %v243
    %v245 = vpop.f32.mrb[0].mxu0
    %v246 = vadd.f32 %v122, %v245
    %247 = vmatprep.mubr.bf16.mxu0 0
    %248 = vmatmul.mubr.bf16.gmra.mrb[0].mxu0 %v190
    %v249 = vpop.f32.mrb[0].mxu0
    %v250 = vadd.f32 %v118, %v249
    %v251 = vpop.f32.mrb[0].mxu0
    %v252 = vadd.f32 %v122, %v251
    %v253 = vpop.f32.mrb[0].mxu0
    %v254 = vadd.f32 %v118, %v253
    %v255 = vpop.f32.mrb[0].mxu0
    %v256 = vadd.f32 %v122, %v255
    %257 = vmatprep.mubr.bf16.mxu0 0
    %258 = vmatmul.mubr.bf16.gmra.mrb[0].mxu0 %v193
    %v259 = vpop.f32.mrb[0].mxu0
    %v260 = vadd.f32 %v118, %v259
    %v261 = vpop.f32.mrb[0].mxu0
    %v262 = vadd.f32 %v122, %v261
    %v263 = vpop.f32.mrb[0].mxu0
    %v264 = vadd.f32 %v118, %v263
    %v265 = vpop.f32.mrb[0].mxu0
    %v266 = vadd.f32 %v122, %v265
    %267 = vdwg.mxu0
    %268 = vmatprep.subr.bf16.mxu0 0
    %269 = vmatpush1.bf16.msra.mxu0 %v172
    %270 = vmatprep.subr.bf16.mxu0 0
    %271 = vmatpush1.bf16.msra.mxu0 %v175
    %272 = vmatprep.subr.bf16.mxu0 0
    %273 = vmatpush1.bf16.msra.mxu0 0
    %274 = vmatprep.subr.bf16.mxu0 0
    %275 = vmatpush1.bf16.msra.mxu0 0
    %276 = vmatprep.subr.bf16.mxu0 0
    %277 = vmatpush1.bf16.msra.mxu0 0
    %278 = vmatprep.subr.bf16.mxu0 0
    %279 = vmatpush1.bf16.msra.mxu0 0
    %280 = vmatprep.subr.bf16.mxu0 0
    %281 = vmatpush1.bf16.msra.mxu0 0
    %282 = vmatprep.subr.bf16.mxu0 0
    %283 = vmatpush1.bf16.msra.mxu0 0
    %284 = vmatprep.subr.bf16.mxu0 0
    %285 = vmatpush1.bf16.msra.mxu0 0
    %286 = vmatprep.subr.bf16.mxu0 0
    %287 = vmatpush1.bf16.msra.mxu0 0
    %288 = vmatprep.subr.bf16.mxu0 0
    %289 = vmatpush1.bf16.msra.mxu0 0
    %290 = vmatprep.subr.bf16.mxu0 0
    %291 = vmatpush1.bf16.msra.mxu0 0
    %292 = vmatprep.subr.bf16.mxu0 0
    %293 = vmatpush1.bf16.msra.mxu0 0
    %294 = vmatprep.subr.bf16.mxu0 0
    %295 = vmatpush1.bf16.msra.mxu0 0
    %296 = vmatprep.subr.bf16.mxu0 0
    %297 = vmatpush1.bf16.msra.mxu0 0
    %298 = vmatprep.subr.bf16.mxu0 0
    %299 = vmatpush1.bf16.msra.mxu0 0
    %300 = vmatprep.mubr.bf16.mxu0 0
    %301 = vmatmul.mubr.bf16.gmra.mrb[0].mxu0 %v184
    %v302 = vpop.f32.mrb[0].mxu0
    %v303 = vadd.f32 %v126, %v302
    %v304 = vpop.f32.mrb[0].mxu0
    %v305 = vpop.f32.mrb[0].mxu0
    %v306 = vadd.f32 %v126, %v305
    %v307 = vpop.f32.mrb[0].mxu0
    %308 = vmatprep.mubr.bf16.mxu0 0
    %309 = vmatmul.mubr.bf16.gmra.mrb[0].mxu0 %v187
    %v310 = vpop.f32.mrb[0].mxu0
    %v311 = vadd.f32 %v126, %v310
    %v312 = vpop.f32.mrb[0].mxu0
    %v313 = vpop.f32.mrb[0].mxu0
    %v314 = vadd.f32 %v126, %v313
    %v315 = vpop.f32.mrb[0].mxu0
    %316 = vmatprep.mubr.bf16.mxu0 0
    %317 = vmatmul.mubr.bf16.gmra.mrb[0].mxu0 %v190
    %v318 = vpop.f32.mrb[0].mxu0
    %v319 = vadd.f32 %v126, %v318
    %v320 = vpop.f32.mrb[0].mxu0
    %v321 = vpop.f32.mrb[0].mxu0
    %v322 = vadd.f32 %v126, %v321
    %v323 = vpop.f32.mrb[0].mxu0
    %324 = vmatprep.mubr.bf16.mxu0 0
    %325 = vmatmul.mubr.bf16.gmra.mrb[0].mxu0 %v193
    %v326 = vpop.f32.mrb[0].mxu0
    %v327 = vadd.f32 %v126, %v326
    %v328 = vpop.f32.mrb[0].mxu0
    %v329 = vpop.f32.mrb[0].mxu0
    %v330 = vadd.f32 %v126, %v329
    %v331 = vpop.f32.mrb[0].mxu0
    %332 = vdwg.mxu0
    %v333 = vld [vmem:[%s3] sm:$0xff]
    %v334 = vld [vmem:[%s3 + $0x8] sm:$0xf]
    %v335 = vld [vmem:[%s3 + $0xc] sm:$0xff]
    %v336 = vld [vmem:[%s3 + $0x14] sm:$0xf]
    %v337 = vld [vmem:[%s3 + $0x18] sm:$0xff]
    %v338 = vld [vmem:[%s3 + $0x20] sm:$0xf]
    %v339 = vld [vmem:[%s3 + $0x24] sm:$0xff]
    %v340 = vld [vmem:[%s3 + $0x2c] sm:$0xf]
    %v341 = vld [vmem:[%s3 + $0x30] sm:$0xff]
    %v342 = vld [vmem:[%s3 + $0x38] sm:$0xf]
    %v343 = vld [vmem:[%s3 + $0x3c] sm:$0xff]
    %v344 = vld [vmem:[%s3 + $0x44] sm:$0xf]
    %v345 = vld [vmem:[%s3 + $0x48] sm:$0xff]
    %v346 = vld [vmem:[%s3 + $0x50] sm:$0xf]
    %v347 = vld [vmem:[%s3 + $0x54] sm:$0xff]
    %v348 = vld [vmem:[%s3 + $0x5c] sm:$0xf]
    %v349 = vld [vmem:[%s3 + $0x60] sm:$0xff]
    %v350 = vld [vmem:[%s3 + $0x68] sm:$0xf]
    %v351 = vld [vmem:[%s3 + $0x6c] sm:$0xff]
    %v352 = vld [vmem:[%s3 + $0x74] sm:$0xf]
    %v353 = vld [vmem:[%s3 + $0x78] sm:$0xff]
    %v354 = vld [vmem:[%s3 + $0x80] sm:$0xf]
    %v355 = vld [vmem:[%s3 + $0x84] sm:$0xff]
    %v356 = vld [vmem:[%s3 + $0x8c] sm:$0xf]
    %v357 = vld [vmem:[%s3 + $0x90] sm:$0xff]
    %v358 = vld [vmem:[%s3 + $0x98] sm:$0xf]
    %v359 = vld [vmem:[%s3 + $0x9c] sm:$0xff]
    %v360 = vld [vmem:[%s3 + $0xa4] sm:$0xf]
    %v361 = vld [vmem:[%s3 + $0xa8] sm:$0xff]
    %v362 = vld [vmem:[%s3 + $0xb0] sm:$0xf]
    %v363 = vld [vmem:[%s3 + $0xb4] sm:$0xff]
    %v364 = vld [vmem:[%s3 + $0xbc] sm:$0xf]
    %v365 = vld [vmem:[%s5] sm:$0x1]
    %v398 = vunpack.c.l.b16 %v333
    %v399 = vunpack.c.h.b16 %v333
    %v400 = vunpack.c.l.b16 %v334
    %v401 = vunpack.c.l.b16 %v335
    %v402 = vunpack.c.h.b16 %v335
    %v403 = vunpack.c.l.b16 %v336
    %v404 = vunpack.c.l.b16 %v337
    %v405 = vunpack.c.h.b16 %v337
    %v406 = vunpack.c.l.b16 %v338
    %v407 = vunpack.c.l.b16 %v339
    %v408 = vunpack.c.h.b16 %v339
    %v409 = vunpack.c.l.b16 %v340
    %v410 = vunpack.c.l.b16 %v341
    %v411 = vunpack.c.h.b16 %v341
    %v412 = vunpack.c.l.b16 %v342
    %v413 = vunpack.c.l.b16 %v343
    %v414 = vunpack.c.h.b16 %v343
    %v415 = vunpack.c.l.b16 %v344
    %v416 = vunpack.c.l.b16 %v345
    %v417 = vunpack.c.h.b16 %v345
    %v418 = vunpack.c.l.b16 %v346
    %v419 = vunpack.c.l.b16 %v347
    %v420 = vunpack.c.h.b16 %v347
    %v421 = vunpack.c.l.b16 %v348
    %v422 = vunpack.c.l.b16 %v349
    %v423 = vunpack.c.h.b16 %v349
    %v424 = vunpack.c.l.b16 %v350
    %v425 = vunpack.c.l.b16 %v351
    %v426 = vunpack.c.h.b16 %v351
    %v427 = vunpack.c.l.b16 %v352
    %v428 = vunpack.c.l.b16 %v353
    %v429 = vunpack.c.h.b16 %v353
    %v430 = vunpack.c.l.b16 %v354
    %v431 = vunpack.c.l.b16 %v355
    %v432 = vunpack.c.h.b16 %v355
    %v433 = vunpack.c.l.b16 %v356
    %v434 = vunpack.c.l.b16 %v357
    %v435 = vunpack.c.h.b16 %v357
    %v436 = vunpack.c.l.b16 %v358
    %v437 = vunpack.c.l.b16 %v359
    %v438 = vunpack.c.h.b16 %v359
    %v439 = vunpack.c.l.b16 %v360
    %v440 = vunpack.c.l.b16 %v361
    %v441 = vunpack.c.h.b16 %v361
    %v442 = vunpack.c.l.b16 %v362
    %v443 = vunpack.c.l.b16 %v363
    %v444 = vunpack.c.h.b16 %v363
    %v445 = vunpack.c.l.b16 %v364
    %v446 = vpack.c.b16 %v401, %v398
    %v447 = vpack.c.b16 %v402, %v399
    %v448 = vpack.c.b16 %v403, %v400
    %v449 = vpack.c.b16 %v407, %v404
    %v450 = vpack.c.b16 %v408, %v405
    %v451 = vpack.c.b16 %v409, %v406
    %v452 = vpack.c.b16 %v413, %v410
    %v453 = vpack.c.b16 %v414, %v411
    %v454 = vpack.c.b16 %v415, %v412
    %v455 = vpack.c.b16 %v419, %v416
    %v456 = vpack.c.b16 %v420, %v417
    %v457 = vpack.c.b16 %v421, %v418
    %v458 = vpack.c.b16 %v425, %v422
    %v459 = vpack.c.b16 %v426, %v423
    %v460 = vpack.c.b16 %v427, %v424
    %v461 = vpack.c.b16 %v431, %v428
    %v462 = vpack.c.b16 %v432, %v429
    %v463 = vpack.c.b16 %v433, %v430
    %v464 = vpack.c.b16 %v437, %v434
    %v465 = vpack.c.b16 %v438, %v435
    %v466 = vpack.c.b16 %v439, %v436
    %v467 = vpack.c.b16 %v443, %v440
    %v468 = vpack.c.b16 %v444, %v441
    %v469 = vpack.c.b16 %v445, %v442
    %494 = vmatprep.subr.bf16.mxu0 %v447
    %495 = vmatpush1.bf16.msra.mxu0 %v446
    %496 = vmatprep.subr.bf16.mxu0 %v450
    %497 = vmatpush1.bf16.msra.mxu0 %v449
    %498 = vmatprep.subr.bf16.mxu0 %v453
    %499 = vmatpush1.bf16.msra.mxu0 %v452
    %500 = vmatprep.subr.bf16.mxu0 %v456
    %501 = vmatpush1.bf16.msra.mxu0 %v455
    %502 = vmatprep.subr.bf16.mxu0 %v459
    %503 = vmatpush1.bf16.msra.mxu0 %v458
    %504 = vmatprep.subr.bf16.mxu0 %v462
    %505 = vmatpush1.bf16.msra.mxu0 %v461
    %506 = vmatprep.subr.bf16.mxu0 %v465
    %507 = vmatpush1.bf16.msra.mxu0 %v464
    %508 = vmatprep.subr.bf16.mxu0 %v468
    %509 = vmatpush1.bf16.msra.mxu0 %v467
    %510 = vmatprep.subr.bf16.mxu0 0
    %511 = vmatpush1.bf16.msra.mxu0 0
    %512 = vmatprep.subr.bf16.mxu0 0
    %513 = vmatpush1.bf16.msra.mxu0 0
    %514 = vmatprep.subr.bf16.mxu0 0
    %515 = vmatpush1.bf16.msra.mxu0 0
    %516 = vmatprep.subr.bf16.mxu0 0
    %517 = vmatpush1.bf16.msra.mxu0 0
    %518 = vmatprep.subr.bf16.mxu0 0
    %519 = vmatpush1.bf16.msra.mxu0 0
    %520 = vmatprep.subr.bf16.mxu0 0
    %521 = vmatpush1.bf16.msra.mxu0 0
    %522 = vmatprep.subr.bf16.mxu0 0
    %523 = vmatpush1.bf16.msra.mxu0 0
    %524 = vmatprep.subr.bf16.mxu0 0
    %525 = vmatpush1.bf16.msra.mxu0 0
    %526 = vmatprep.mubr.bf16.mxu0 0
    %527 = vmatmul.mubr.bf16.gmra.mrb[0].mxu0 0
    %v528 = vpop.f32.mrb[0].mxu0
    %v529 = vadd.f32 0.0, %v528
    %v530 = vpop.f32.mrb[0].mxu0
    %v531 = vadd.f32 0.0, %v530
    %v532 = vpop.f32.mrb[0].mxu0
    %v533 = vpop.f32.mrb[0].mxu0
    %534 = vdwg.mxu0
    %535 = vmatprep.subr.bf16.mxu0 0
    %536 = vmatpush1.bf16.msra.mxu0 %v448
    %537 = vmatprep.subr.bf16.mxu0 0
    %538 = vmatpush1.bf16.msra.mxu0 %v451
    %539 = vmatprep.subr.bf16.mxu0 0
    %540 = vmatpush1.bf16.msra.mxu0 %v454
    %541 = vmatprep.subr.bf16.mxu0 0
    %542 = vmatpush1.bf16.msra.mxu0 %v457
    %543 = vmatprep.subr.bf16.mxu0 0
    %544 = vmatpush1.bf16.msra.mxu0 %v460
    %545 = vmatprep.subr.bf16.mxu0 0
    %546 = vmatpush1.bf16.msra.mxu0 %v463
    %547 = vmatprep.subr.bf16.mxu0 0
    %548 = vmatpush1.bf16.msra.mxu0 %v466
    %549 = vmatprep.subr.bf16.mxu0 0
    %550 = vmatpush1.bf16.msra.mxu0 %v469
    %551 = vmatprep.subr.bf16.mxu0 0
    %552 = vmatpush1.bf16.msra.mxu0 0
    %553 = vmatprep.subr.bf16.mxu0 0
    %554 = vmatpush1.bf16.msra.mxu0 0
    %555 = vmatprep.subr.bf16.mxu0 0
    %556 = vmatpush1.bf16.msra.mxu0 0
    %557 = vmatprep.subr.bf16.mxu0 0
    %558 = vmatpush1.bf16.msra.mxu0 0
    %559 = vmatprep.subr.bf16.mxu0 0
    %560 = vmatpush1.bf16.msra.mxu0 0
    %561 = vmatprep.subr.bf16.mxu0 0
    %562 = vmatpush1.bf16.msra.mxu0 0
    %563 = vmatprep.subr.bf16.mxu0 0
    %564 = vmatpush1.bf16.msra.mxu0 0
    %565 = vmatprep.subr.bf16.mxu0 0
    %566 = vmatpush1.bf16.msra.mxu0 0
    %567 = vmatprep.mubr.bf16.mxu0 0
    %568 = vmatmul.mubr.bf16.gmra.mrb[0].mxu0 0
    %v569 = vpop.f32.mrb[0].mxu0
    %v570 = vadd.f32 0.0, %v569
    %v571 = vpop.f32.mrb[0].mxu0
    %v572 = vpop.f32.mrb[0].mxu0
    %v573 = vpop.f32.mrb[0].mxu0
    %574 = vdwg.mxu0
    %v575 = vadd.f32 %v230, %v529
    %v576 = vxor.u32 %v575, 2147483648
    %v577 = vmul.f32 %v576, 1.442695
    %v578 = vpow.pop %v577
    %v579 = vadd.f32 %v578, 1.0
    %v580 = vrcp.pop %v579
    %v581 = vmul.f32 1.0, %v580
    %v582 = vadd.f32 %v232, %v531
    %v583 = vxor.u32 %v582, 2147483648
    %v584 = vmul.f32 %v583, 1.442695
    %v585 = vpow.pop %v584
    %v586 = vadd.f32 %v585, 1.0
    %v587 = vrcp.pop %v586
    %v588 = vmul.f32 1.0, %v587
    %v590 = vlaneseq
    %v591 = vshrl.u32 %v590, 7
    %v592 = vsub.s32 0, %v591
    %v593 = vrot.slane %v365, %v592
    %v595 = vadd.f32 %v570, %v593
    %v596 = vmul.f32 %v581, %v595
    %v597 = vadd.f32 %v303, %v596
    %v598 = vtanh.pop %v597
    %v599 = vsub.f32 1.0, %v588
    %v600 = vmul.f32 %v599, %v598
    %v601 = vmul.f32 %v588, 0.0
    %v602 = vadd.f32 %v600, %v601
    %v603 = vpack.c.bf16 %v602, %v602
    %604 = vmatprep.subr.bf16.mxu0 %v447
    %605 = vmatpush1.bf16.msra.mxu0 %v446
    %606 = vmatprep.subr.bf16.mxu0 %v450
    %607 = vmatpush1.bf16.msra.mxu0 %v449
    %608 = vmatprep.subr.bf16.mxu0 %v453
    %609 = vmatpush1.bf16.msra.mxu0 %v452
    %610 = vmatprep.subr.bf16.mxu0 %v456
    %611 = vmatpush1.bf16.msra.mxu0 %v455
    %612 = vmatprep.subr.bf16.mxu0 %v459
    %613 = vmatpush1.bf16.msra.mxu0 %v458
    %614 = vmatprep.subr.bf16.mxu0 %v462
    %615 = vmatpush1.bf16.msra.mxu0 %v461
    %616 = vmatprep.subr.bf16.mxu0 %v465
    %617 = vmatpush1.bf16.msra.mxu0 %v464
    %618 = vmatprep.subr.bf16.mxu0 %v468
    %619 = vmatpush1.bf16.msra.mxu0 %v467
    %620 = vmatprep.subr.bf16.mxu0 0
    %621 = vmatpush1.bf16.msra.mxu0 0
    %622 = vmatprep.subr.bf16.mxu0 0
    %623 = vmatpush1.bf16.msra.mxu0 0
    %624 = vmatprep.subr.bf16.mxu0 0
    %625 = vmatpush1.bf16.msra.mxu0 0
    %626 = vmatprep.subr.bf16.mxu0 0
    %627 = vmatpush1.bf16.msra.mxu0 0
    %628 = vmatprep.subr.bf16.mxu0 0
    %629 = vmatpush1.bf16.msra.mxu0 0
    %630 = vmatprep.subr.bf16.mxu0 0
    %631 = vmatpush1.bf16.msra.mxu0 0
    %632 = vmatprep.subr.bf16.mxu0 0
    %633 = vmatpush1.bf16.msra.mxu0 0
    %634 = vmatprep.subr.bf16.mxu0 0
    %635 = vmatpush1.bf16.msra.mxu0 0
    %636 = vmatprep.mubr.bf16.mxu0 0
    %637 = vmatmul.mubr.bf16.gmra.mrb[0].mxu0 %v603
    %v638 = vpop.f32.mrb[0].mxu0
    %v639 = vadd.f32 0.0, %v638
    %v640 = vpop.f32.mrb[0].mxu0
    %v641 = vadd.f32 0.0, %v640
    %v642 = vpop.f32.mrb[0].mxu0
    %v643 = vpop.f32.mrb[0].mxu0
    %644 = vdwg.mxu0
    %645 = vmatprep.subr.bf16.mxu0 0
    %646 = vmatpush1.bf16.msra.mxu0 %v448
    %647 = vmatprep.subr.bf16.mxu0 0
    %648 = vmatpush1.bf16.msra.mxu0 %v451
    %649 = vmatprep.subr.bf16.mxu0 0
    %650 = vmatpush1.bf16.msra.mxu0 %v454
    %651 = vmatprep.subr.bf16.mxu0 0
    %652 = vmatpush1.bf16.msra.mxu0 %v457
    %653 = vmatprep.subr.bf16.mxu0 0
    %654 = vmatpush1.bf16.msra.mxu0 %v460
    %655 = vmatprep.subr.bf16.mxu0 0
    %656 = vmatpush1.bf16.msra.mxu0 %v463
    %657 = vmatprep.subr.bf16.mxu0 0
    %658 = vmatpush1.bf16.msra.mxu0 %v466
    %659 = vmatprep.subr.bf16.mxu0 0
    %660 = vmatpush1.bf16.msra.mxu0 %v469
    %661 = vmatprep.subr.bf16.mxu0 0
    %662 = vmatpush1.bf16.msra.mxu0 0
    %663 = vmatprep.subr.bf16.mxu0 0
    %664 = vmatpush1.bf16.msra.mxu0 0
    %665 = vmatprep.subr.bf16.mxu0 0
    %666 = vmatpush1.bf16.msra.mxu0 0
    %667 = vmatprep.subr.bf16.mxu0 0
    %668 = vmatpush1.bf16.msra.mxu0 0
    %669 = vmatprep.subr.bf16.mxu0 0
    %670 = vmatpush1.bf16.msra.mxu0 0
    %671 = vmatprep.subr.bf16.mxu0 0
    %672 = vmatpush1.bf16.msra.mxu0 0
    %673 = vmatprep.subr.bf16.mxu0 0
    %674 = vmatpush1.bf16.msra.mxu0 0
    %675 = vmatprep.subr.bf16.mxu0 0
    %676 = vmatpush1.bf16.msra.mxu0 0
    %677 = vmatprep.mubr.bf16.mxu0 0
    %678 = vmatmul.mubr.bf16.gmra.mrb[0].mxu0 %v603
    %v679 = vpop.f32.mrb[0].mxu0
    %v680 = vadd.f32 0.0, %v679
    %v681 = vpop.f32.mrb[0].mxu0
    %v682 = vpop.f32.mrb[0].mxu0
    %v683 = vpop.f32.mrb[0].mxu0
    %684 = vdwg.mxu0
    %v685 = vadd.f32 %v234, %v639
    %v686 = vxor.u32 %v685, 2147483648
    %v687 = vmul.f32 %v686, 1.442695
    %v688 = vpow.pop %v687
    %v689 = vadd.f32 %v688, 1.0
    %v690 = vrcp.pop %v689
    %v691 = vmul.f32 1.0, %v690
    %v692 = vadd.f32 %v236, %v641
    %v693 = vxor.u32 %v692, 2147483648
    %v694 = vmul.f32 %v693, 1.442695
    %v695 = vpow.pop %v694
    %v696 = vadd.f32 %v695, 1.0
    %v697 = vrcp.pop %v696
    %v698 = vmul.f32 1.0, %v697
    %v699 = vadd.f32 %v680, %v593
    %v700 = vmul.f32 %v691, %v699
    %v701 = vadd.f32 %v306, %v700
    %v702 = vtanh.pop %v701
    %v703 = vsub.f32 1.0, %v698
    %v704 = vmul.f32 %v703, %v702
    %v705 = vmul.f32 %v698, %v602
    %v706 = vadd.f32 %v704, %v705
    %v707 = vpack.c.bf16 %v706, %v706
    %708 = vmatprep.subr.bf16.mxu0 %v447
    %709 = vmatpush1.bf16.msra.mxu0 %v446
    %710 = vmatprep.subr.bf16.mxu0 %v450
    %711 = vmatpush1.bf16.msra.mxu0 %v449
    %712 = vmatprep.subr.bf16.mxu0 %v453
    %713 = vmatpush1.bf16.msra.mxu0 %v452
    %714 = vmatprep.subr.bf16.mxu0 %v456
    %715 = vmatpush1.bf16.msra.mxu0 %v455
    %716 = vmatprep.subr.bf16.mxu0 %v459
    %717 = vmatpush1.bf16.msra.mxu0 %v458
    %718 = vmatprep.subr.bf16.mxu0 %v462
    %719 = vmatpush1.bf16.msra.mxu0 %v461
    %720 = vmatprep.subr.bf16.mxu0 %v465
    %721 = vmatpush1.bf16.msra.mxu0 %v464
    %722 = vmatprep.subr.bf16.mxu0 %v468
    %723 = vmatpush1.bf16.msra.mxu0 %v467
    %724 = vmatprep.subr.bf16.mxu0 0
    %725 = vmatpush1.bf16.msra.mxu0 0
    %726 = vmatprep.subr.bf16.mxu0 0
    %727 = vmatpush1.bf16.msra.mxu0 0
    %728 = vmatprep.subr.bf16.mxu0 0
    %729 = vmatpush1.bf16.msra.mxu0 0
    %730 = vmatprep.subr.bf16.mxu0 0
    %731 = vmatpush1.bf16.msra.mxu0 0
    %732 = vmatprep.subr.bf16.mxu0 0
    %733 = vmatpush1.bf16.msra.mxu0 0
    %734 = vmatprep.subr.bf16.mxu0 0
    %735 = vmatpush1.bf16.msra.mxu0 0
    %736 = vmatprep.subr.bf16.mxu0 0
    %737 = vmatpush1.bf16.msra.mxu0 0
    %738 = vmatprep.subr.bf16.mxu0 0
    %739 = vmatpush1.bf16.msra.mxu0 0
    %740 = vmatprep.mubr.bf16.mxu0 0
    %741 = vmatmul.mubr.bf16.gmra.mrb[0].mxu0 %v707
    %v742 = vpop.f32.mrb[0].mxu0
    %v743 = vadd.f32 0.0, %v742
    %v744 = vpop.f32.mrb[0].mxu0
    %v745 = vadd.f32 0.0, %v744
    %v746 = vpop.f32.mrb[0].mxu0
    %v747 = vpop.f32.mrb[0].mxu0
    %748 = vdwg.mxu0
    %749 = vmatprep.subr.bf16.mxu0 0
    %750 = vmatpush1.bf16.msra.mxu0 %v448
    %751 = vmatprep.subr.bf16.mxu0 0
    %752 = vmatpush1.bf16.msra.mxu0 %v451
    %753 = vmatprep.subr.bf16.mxu0 0
    %754 = vmatpush1.bf16.msra.mxu0 %v454
    %755 = vmatprep.subr.bf16.mxu0 0
    %756 = vmatpush1.bf16.msra.mxu0 %v457
    %757 = vmatprep.subr.bf16.mxu0 0
    %758 = vmatpush1.bf16.msra.mxu0 %v460
    %759 = vmatprep.subr.bf16.mxu0 0
    %760 = vmatpush1.bf16.msra.mxu0 %v463
    %761 = vmatprep.subr.bf16.mxu0 0
    %762 = vmatpush1.bf16.msra.mxu0 %v466
    %763 = vmatprep.subr.bf16.mxu0 0
    %764 = vmatpush1.bf16.msra.mxu0 %v469
    %765 = vmatprep.subr.bf16.mxu0 0
    %766 = vmatpush1.bf16.msra.mxu0 0
    %767 = vmatprep.subr.bf16.mxu0 0
    %768 = vmatpush1.bf16.msra.mxu0 0
    %769 = vmatprep.subr.bf16.mxu0 0
    %770 = vmatpush1.bf16.msra.mxu0 0
    %771 = vmatprep.subr.bf16.mxu0 0
    %772 = vmatpush1.bf16.msra.mxu0 0
    %773 = vmatprep.subr.bf16.mxu0 0
    %774 = vmatpush1.bf16.msra.mxu0 0
    %775 = vmatprep.subr.bf16.mxu0 0
    %776 = vmatpush1.bf16.msra.mxu0 0
    %777 = vmatprep.subr.bf16.mxu0 0
    %778 = vmatpush1.bf16.msra.mxu0 0
    %779 = vmatprep.subr.bf16.mxu0 0
    %780 = vmatpush1.bf16.msra.mxu0 0
    %781 = vmatprep.mubr.bf16.mxu0 0
    %782 = vmatmul.mubr.bf16.gmra.mrb[0].mxu0 %v707
    %v783 = vpop.f32.mrb[0].mxu0
    %v784 = vadd.f32 0.0, %v783
    %v785 = vpop.f32.mrb[0].mxu0
    %v786 = vpop.f32.mrb[0].mxu0
    %v787 = vpop.f32.mrb[0].mxu0
    %788 = vdwg.mxu0
    %v789 = vadd.f32 %v240, %v743
    %v790 = vxor.u32 %v789, 2147483648
    %v791 = vmul.f32 %v790, 1.442695
    %v792 = vpow.pop %v791
    %v793 = vadd.f32 %v792, 1.0
    %v794 = vrcp.pop %v793
    %v795 = vmul.f32 1.0, %v794
    %v796 = vadd.f32 %v242, %v745
    %v797 = vxor.u32 %v796, 2147483648
    %v798 = vmul.f32 %v797, 1.442695
    %v799 = vpow.pop %v798
    %v800 = vadd.f32 %v799, 1.0
    %v801 = vrcp.pop %v800
    %v802 = vmul.f32 1.0, %v801
    %v803 = vadd.f32 %v784, %v593
    %v804 = vmul.f32 %v795, %v803
    %v805 = vadd.f32 %v311, %v804
    %v806 = vtanh.pop %v805
    %v807 = vsub.f32 1.0, %v802
    %v808 = vmul.f32 %v807, %v806
    %v809 = vmul.f32 %v802, %v706
    %v810 = vadd.f32 %v808, %v809
    %v811 = vpack.c.bf16 %v810, %v810
    %812 = vmatprep.subr.bf16.mxu0 %v447
    %813 = vmatpush1.bf16.msra.mxu0 %v446
    %814 = vmatprep.subr.bf16.mxu0 %v450
    %815 = vmatpush1.bf16.msra.mxu0 %v449
    %816 = vmatprep.subr.bf16.mxu0 %v453
    %817 = vmatpush1.bf16.msra.mxu0 %v452
    %818 = vmatprep.subr.bf16.mxu0 %v456
    %819 = vmatpush1.bf16.msra.mxu0 %v455
    %820 = vmatprep.subr.bf16.mxu0 %v459
    %821 = vmatpush1.bf16.msra.mxu0 %v458
    %822 = vmatprep.subr.bf16.mxu0 %v462
    %823 = vmatpush1.bf16.msra.mxu0 %v461
    %824 = vmatprep.subr.bf16.mxu0 %v465
    %825 = vmatpush1.bf16.msra.mxu0 %v464
    %826 = vmatprep.subr.bf16.mxu0 %v468
    %827 = vmatpush1.bf16.msra.mxu0 %v467
    %828 = vmatprep.subr.bf16.mxu0 0
    %829 = vmatpush1.bf16.msra.mxu0 0
    %830 = vmatprep.subr.bf16.mxu0 0
    %831 = vmatpush1.bf16.msra.mxu0 0
    %832 = vmatprep.subr.bf16.mxu0 0
    %833 = vmatpush1.bf16.msra.mxu0 0
    %834 = vmatprep.subr.bf16.mxu0 0
    %835 = vmatpush1.bf16.msra.mxu0 0
    %836 = vmatprep.subr.bf16.mxu0 0
    %837 = vmatpush1.bf16.msra.mxu0 0
    %838 = vmatprep.subr.bf16.mxu0 0
    %839 = vmatpush1.bf16.msra.mxu0 0
    %840 = vmatprep.subr.bf16.mxu0 0
    %841 = vmatpush1.bf16.msra.mxu0 0
    %842 = vmatprep.subr.bf16.mxu0 0
    %843 = vmatpush1.bf16.msra.mxu0 0
    %844 = vmatprep.mubr.bf16.mxu0 0
    %845 = vmatmul.mubr.bf16.gmra.mrb[0].mxu0 %v811
    %v846 = vpop.f32.mrb[0].mxu0
    %v847 = vadd.f32 0.0, %v846
    %v848 = vpop.f32.mrb[0].mxu0
    %v849 = vadd.f32 0.0, %v848
    %v850 = vpop.f32.mrb[0].mxu0
    %v851 = vpop.f32.mrb[0].mxu0
    %852 = vdwg.mxu0
    %853 = vmatprep.subr.bf16.mxu0 0
    %854 = vmatpush1.bf16.msra.mxu0 %v448
    %855 = vmatprep.subr.bf16.mxu0 0
    %856 = vmatpush1.bf16.msra.mxu0 %v451
    %857 = vmatprep.subr.bf16.mxu0 0
    %858 = vmatpush1.bf16.msra.mxu0 %v454
    %859 = vmatprep.subr.bf16.mxu0 0
    %860 = vmatpush1.bf16.msra.mxu0 %v457
    %861 = vmatprep.subr.bf16.mxu0 0
    %862 = vmatpush1.bf16.msra.mxu0 %v460
    %863 = vmatprep.subr.bf16.mxu0 0
    %864 = vmatpush1.bf16.msra.mxu0 %v463
    %865 = vmatprep.subr.bf16.mxu0 0
    %866 = vmatpush1.bf16.msra.mxu0 %v466
    %867 = vmatprep.subr.bf16.mxu0 0
    %868 = vmatpush1.bf16.msra.mxu0 %v469
    %869 = vmatprep.subr.bf16.mxu0 0
    %870 = vmatpush1.bf16.msra.mxu0 0
    %871 = vmatprep.subr.bf16.mxu0 0
    %872 = vmatpush1.bf16.msra.mxu0 0
    %873 = vmatprep.subr.bf16.mxu0 0
    %874 = vmatpush1.bf16.msra.mxu0 0
    %875 = vmatprep.subr.bf16.mxu0 0
    %876 = vmatpush1.bf16.msra.mxu0 0
    %877 = vmatprep.subr.bf16.mxu0 0
    %878 = vmatpush1.bf16.msra.mxu0 0
    %879 = vmatprep.subr.bf16.mxu0 0
    %880 = vmatpush1.bf16.msra.mxu0 0
    %881 = vmatprep.subr.bf16.mxu0 0
    %882 = vmatpush1.bf16.msra.mxu0 0
    %883 = vmatprep.subr.bf16.mxu0 0
    %884 = vmatpush1.bf16.msra.mxu0 0
    %885 = vmatprep.mubr.bf16.mxu0 0
    %886 = vmatmul.mubr.bf16.gmra.mrb[0].mxu0 %v811
    %v887 = vpop.f32.mrb[0].mxu0
    %v888 = vadd.f32 0.0, %v887
    %v889 = vpop.f32.mrb[0].mxu0
    %v890 = vpop.f32.mrb[0].mxu0
    %v891 = vpop.f32.mrb[0].mxu0
    %892 = vdwg.mxu0
    %v893 = vadd.f32 %v244, %v847
    %v894 = vxor.u32 %v893, 2147483648
    %v895 = vmul.f32 %v894, 1.442695
    %v896 = vpow.pop %v895
    %v897 = vadd.f32 %v896, 1.0
    %v898 = vrcp.pop %v897
    %v899 = vmul.f32 1.0, %v898
    %v900 = vadd.f32 %v246, %v849
    %v901 = vxor.u32 %v900, 2147483648
    %v902 = vmul.f32 %v901, 1.442695
    %v903 = vpow.pop %v902
    %v904 = vadd.f32 %v903, 1.0
    %v905 = vrcp.pop %v904
    %v906 = vmul.f32 1.0, %v905
    %v907 = vadd.f32 %v888, %v593
    %v908 = vmul.f32 %v899, %v907
    %v909 = vadd.f32 %v314, %v908
    %v910 = vtanh.pop %v909
    %v911 = vsub.f32 1.0, %v906
    %v912 = vmul.f32 %v911, %v910
    %v913 = vmul.f32 %v906, %v810
    %v914 = vadd.f32 %v912, %v913
    %v915 = vpack.c.bf16 %v914, %v914
    %916 = vmatprep.subr.bf16.mxu0 %v447
    %917 = vmatpush1.bf16.msra.mxu0 %v446
    %918 = vmatprep.subr.bf16.mxu0 %v450
    %919 = vmatpush1.bf16.msra.mxu0 %v449
    %920 = vmatprep.subr.bf16.mxu0 %v453
    %921 = vmatpush1.bf16.msra.mxu0 %v452
    %922 = vmatprep.subr.bf16.mxu0 %v456
    %923 = vmatpush1.bf16.msra.mxu0 %v455
    %924 = vmatprep.subr.bf16.mxu0 %v459
    %925 = vmatpush1.bf16.msra.mxu0 %v458
    %926 = vmatprep.subr.bf16.mxu0 %v462
    %927 = vmatpush1.bf16.msra.mxu0 %v461
    %928 = vmatprep.subr.bf16.mxu0 %v465
    %929 = vmatpush1.bf16.msra.mxu0 %v464
    %930 = vmatprep.subr.bf16.mxu0 %v468
    %931 = vmatpush1.bf16.msra.mxu0 %v467
    %932 = vmatprep.subr.bf16.mxu0 0
    %933 = vmatpush1.bf16.msra.mxu0 0
    %934 = vmatprep.subr.bf16.mxu0 0
    %935 = vmatpush1.bf16.msra.mxu0 0
    %936 = vmatprep.subr.bf16.mxu0 0
    %937 = vmatpush1.bf16.msra.mxu0 0
    %938 = vmatprep.subr.bf16.mxu0 0
    %939 = vmatpush1.bf16.msra.mxu0 0
    %940 = vmatprep.subr.bf16.mxu0 0
    %941 = vmatpush1.bf16.msra.mxu0 0
    %942 = vmatprep.subr.bf16.mxu0 0
    %943 = vmatpush1.bf16.msra.mxu0 0
    %944 = vmatprep.subr.bf16.mxu0 0
    %945 = vmatpush1.bf16.msra.mxu0 0
    %946 = vmatprep.subr.bf16.mxu0 0
    %947 = vmatpush1.bf16.msra.mxu0 0
    %948 = vmatprep.mubr.bf16.mxu0 0
    %949 = vmatmul.mubr.bf16.gmra.mrb[0].mxu0 %v915
    %v950 = vpop.f32.mrb[0].mxu0
    %v951 = vadd.f32 0.0, %v950
    %v952 = vpop.f32.mrb[0].mxu0
    %v953 = vadd.f32 0.0, %v952
    %v954 = vpop.f32.mrb[0].mxu0
    %v955 = vpop.f32.mrb[0].mxu0
    %956 = vdwg.mxu0
    %957 = vmatprep.subr.bf16.mxu0 0
    %958 = vmatpush1.bf16.msra.mxu0 %v448
    %959 = vmatprep.subr.bf16.mxu0 0
    %960 = vmatpush1.bf16.msra.mxu0 %v451
    %961 = vmatprep.subr.bf16.mxu0 0
    %962 = vmatpush1.bf16.msra.mxu0 %v454
    %963 = vmatprep.subr.bf16.mxu0 0
    %964 = vmatpush1.bf16.msra.mxu0 %v457
    %965 = vmatprep.subr.bf16.mxu0 0
    %966 = vmatpush1.bf16.msra.mxu0 %v460
    %967 = vmatprep.subr.bf16.mxu0 0
    %968 = vmatpush1.bf16.msra.mxu0 %v463
    %969 = vmatprep.subr.bf16.mxu0 0
    %970 = vmatpush1.bf16.msra.mxu0 %v466
    %971 = vmatprep.subr.bf16.mxu0 0
    %972 = vmatpush1.bf16.msra.mxu0 %v469
    %973 = vmatprep.subr.bf16.mxu0 0
    %974 = vmatpush1.bf16.msra.mxu0 0
    %975 = vmatprep.subr.bf16.mxu0 0
    %976 = vmatpush1.bf16.msra.mxu0 0
    %977 = vmatprep.subr.bf16.mxu0 0
    %978 = vmatpush1.bf16.msra.mxu0 0
    %979 = vmatprep.subr.bf16.mxu0 0
    %980 = vmatpush1.bf16.msra.mxu0 0
    %981 = vmatprep.subr.bf16.mxu0 0
    %982 = vmatpush1.bf16.msra.mxu0 0
    %983 = vmatprep.subr.bf16.mxu0 0
    %984 = vmatpush1.bf16.msra.mxu0 0
    %985 = vmatprep.subr.bf16.mxu0 0
    %986 = vmatpush1.bf16.msra.mxu0 0
    %987 = vmatprep.subr.bf16.mxu0 0
    %988 = vmatpush1.bf16.msra.mxu0 0
    %989 = vmatprep.mubr.bf16.mxu0 0
    %990 = vmatmul.mubr.bf16.gmra.mrb[0].mxu0 %v915
    %v991 = vpop.f32.mrb[0].mxu0
    %v992 = vadd.f32 0.0, %v991
    %v993 = vpop.f32.mrb[0].mxu0
    %v994 = vpop.f32.mrb[0].mxu0
    %v995 = vpop.f32.mrb[0].mxu0
    %996 = vdwg.mxu0
    %v997 = vadd.f32 %v250, %v951
    %v998 = vxor.u32 %v997, 2147483648
    %v999 = vmul.f32 %v998, 1.442695
    %v1000 = vpow.pop %v999
    %v1001 = vadd.f32 %v1000, 1.0
    %v1002 = vrcp.pop %v1001
    %v1003 = vmul.f32 1.0, %v1002
    %v1004 = vadd.f32 %v252, %v953
    %v1005 = vxor.u32 %v1004, 2147483648
    %v1006 = vmul.f32 %v1005, 1.442695
    %v1007 = vpow.pop %v1006
    %v1008 = vadd.f32 %v1007, 1.0
    %v1009 = vrcp.pop %v1008
    %v1010 = vmul.f32 1.0, %v1009
    %v1011 = vadd.f32 %v992, %v593
    %v1012 = vmul.f32 %v1003, %v1011
    %v1013 = vadd.f32 %v319, %v1012
    %v1014 = vtanh.pop %v1013
    %v1015 = vsub.f32 1.0, %v1010
    %v1016 = vmul.f32 %v1015, %v1014
    %v1017 = vmul.f32 %v1010, %v914
    %v1018 = vadd.f32 %v1016, %v1017
    %v1019 = vpack.c.bf16 %v1018, %v1018
    %1020 = vmatprep.subr.bf16.mxu0 %v447
    %1021 = vmatpush1.bf16.msra.mxu0 %v446
    %1022 = vmatprep.subr.bf16.mxu0 %v450
    %1023 = vmatpush1.bf16.msra.mxu0 %v449
    %1024 = vmatprep.subr.bf16.mxu0 %v453
    %1025 = vmatpush1.bf16.msra.mxu0 %v452
    %1026 = vmatprep.subr.bf16.mxu0 %v456
    %1027 = vmatpush1.bf16.msra.mxu0 %v455
    %1028 = vmatprep.subr.bf16.mxu0 %v459
    %1029 = vmatpush1.bf16.msra.mxu0 %v458
    %1030 = vmatprep.subr.bf16.mxu0 %v462
    %1031 = vmatpush1.bf16.msra.mxu0 %v461
    %1032 = vmatprep.subr.bf16.mxu0 %v465
    %1033 = vmatpush1.bf16.msra.mxu0 %v464
    %1034 = vmatprep.subr.bf16.mxu0 %v468
    %1035 = vmatpush1.bf16.msra.mxu0 %v467
    %1036 = vmatprep.subr.bf16.mxu0 0
    %1037 = vmatpush1.bf16.msra.mxu0 0
    %1038 = vmatprep.subr.bf16.mxu0 0
    %1039 = vmatpush1.bf16.msra.mxu0 0
    %1040 = vmatprep.subr.bf16.mxu0 0
    %1041 = vmatpush1.bf16.msra.mxu0 0
    %1042 = vmatprep.subr.bf16.mxu0 0
    %1043 = vmatpush1.bf16.msra.mxu0 0
    %1044 = vmatprep.subr.bf16.mxu0 0
    %1045 = vmatpush1.bf16.msra.mxu0 0
    %1046 = vmatprep.subr.bf16.mxu0 0
    %1047 = vmatpush1.bf16.msra.mxu0 0
    %1048 = vmatprep.subr.bf16.mxu0 0
    %1049 = vmatpush1.bf16.msra.mxu0 0
    %1050 = vmatprep.subr.bf16.mxu0 0
    %1051 = vmatpush1.bf16.msra.mxu0 0
    %1052 = vmatprep.mubr.bf16.mxu0 0
    %1053 = vmatmul.mubr.bf16.gmra.mrb[0].mxu0 %v1019
    %v1054 = vpop.f32.mrb[0].mxu0
    %v1055 = vadd.f32 0.0, %v1054
    %v1056 = vpop.f32.mrb[0].mxu0
    %v1057 = vadd.f32 0.0, %v1056
    %v1058 = vpop.f32.mrb[0].mxu0
    %v1059 = vpop.f32.mrb[0].mxu0
    %1060 = vdwg.mxu0
    %1061 = vmatprep.subr.bf16.mxu0 0
    %1062 = vmatpush1.bf16.msra.mxu0 %v448
    %1063 = vmatprep.subr.bf16.mxu0 0
    %1064 = vmatpush1.bf16.msra.mxu0 %v451
    %1065 = vmatprep.subr.bf16.mxu0 0
    %1066 = vmatpush1.bf16.msra.mxu0 %v454
    %1067 = vmatprep.subr.bf16.mxu0 0
    %1068 = vmatpush1.bf16.msra.mxu0 %v457
    %1069 = vmatprep.subr.bf16.mxu0 0
    %1070 = vmatpush1.bf16.msra.mxu0 %v460
    %1071 = vmatprep.subr.bf16.mxu0 0
    %1072 = vmatpush1.bf16.msra.mxu0 %v463
    %1073 = vmatprep.subr.bf16.mxu0 0
    %1074 = vmatpush1.bf16.msra.mxu0 %v466
    %1075 = vmatprep.subr.bf16.mxu0 0
    %1076 = vmatpush1.bf16.msra.mxu0 %v469
    %1077 = vmatprep.subr.bf16.mxu0 0
    %1078 = vmatpush1.bf16.msra.mxu0 0
    %1079 = vmatprep.subr.bf16.mxu0 0
    %1080 = vmatpush1.bf16.msra.mxu0 0
    %1081 = vmatprep.subr.bf16.mxu0 0
    %1082 = vmatpush1.bf16.msra.mxu0 0
    %1083 = vmatprep.subr.bf16.mxu0 0
    %1084 = vmatpush1.bf16.msra.mxu0 0
    %1085 = vmatprep.subr.bf16.mxu0 0
    %1086 = vmatpush1.bf16.msra.mxu0 0
    %1087 = vmatprep.subr.bf16.mxu0 0
    %1088 = vmatpush1.bf16.msra.mxu0 0
    %1089 = vmatprep.subr.bf16.mxu0 0
    %1090 = vmatpush1.bf16.msra.mxu0 0
    %1091 = vmatprep.subr.bf16.mxu0 0
    %1092 = vmatpush1.bf16.msra.mxu0 0
    %1093 = vmatprep.mubr.bf16.mxu0 0
    %1094 = vmatmul.mubr.bf16.gmra.mrb[0].mxu0 %v1019
    %v1095 = vpop.f32.mrb[0].mxu0
    %v1096 = vadd.f32 0.0, %v1095
    %v1097 = vpop.f32.mrb[0].mxu0
    %v1098 = vpop.f32.mrb[0].mxu0
    %v1099 = vpop.f32.mrb[0].mxu0
    %1100 = vdwg.mxu0
    %v1101 = vadd.f32 %v254, %v1055
    %v1102 = vxor.u32 %v1101, 2147483648
    %v1103 = vmul.f32 %v1102, 1.442695
    %v1104 = vpow.pop %v1103
    %v1105 = vadd.f32 %v1104, 1.0
    %v1106 = vrcp.pop %v1105
    %v1107 = vmul.f32 1.0, %v1106
    %v1108 = vadd.f32 %v256, %v1057
    %v1109 = vxor.u32 %v1108, 2147483648
    %v1110 = vmul.f32 %v1109, 1.442695
    %v1111 = vpow.pop %v1110
    %v1112 = vadd.f32 %v1111, 1.0
    %v1113 = vrcp.pop %v1112
    %v1114 = vmul.f32 1.0, %v1113
    %v1115 = vadd.f32 %v1096, %v593
    %v1116 = vmul.f32 %v1107, %v1115
    %v1117 = vadd.f32 %v322, %v1116
    %v1118 = vtanh.pop %v1117
    %v1119 = vsub.f32 1.0, %v1114
    %v1120 = vmul.f32 %v1119, %v1118
    %v1121 = vmul.f32 %v1114, %v1018
    %v1122 = vadd.f32 %v1120, %v1121
    %v1123 = vpack.c.bf16 %v1122, %v1122
    %1124 = vmatprep.subr.bf16.mxu0 %v447
    %1125 = vmatpush1.bf16.msra.mxu0 %v446
    %1126 = vmatprep.subr.bf16.mxu0 %v450
    %1127 = vmatpush1.bf16.msra.mxu0 %v449
    %1128 = vmatprep.subr.bf16.mxu0 %v453
    %1129 = vmatpush1.bf16.msra.mxu0 %v452
    %1130 = vmatprep.subr.bf16.mxu0 %v456
    %1131 = vmatpush1.bf16.msra.mxu0 %v455
    %1132 = vmatprep.subr.bf16.mxu0 %v459
    %1133 = vmatpush1.bf16.msra.mxu0 %v458
    %1134 = vmatprep.subr.bf16.mxu0 %v462
    %1135 = vmatpush1.bf16.msra.mxu0 %v461
    %1136 = vmatprep.subr.bf16.mxu0 %v465
    %1137 = vmatpush1.bf16.msra.mxu0 %v464
    %1138 = vmatprep.subr.bf16.mxu0 %v468
    %1139 = vmatpush1.bf16.msra.mxu0 %v467
    %1140 = vmatprep.subr.bf16.mxu0 0
    %1141 = vmatpush1.bf16.msra.mxu0 0
    %1142 = vmatprep.subr.bf16.mxu0 0
    %1143 = vmatpush1.bf16.msra.mxu0 0
    %1144 = vmatprep.subr.bf16.mxu0 0
    %1145 = vmatpush1.bf16.msra.mxu0 0
    %1146 = vmatprep.subr.bf16.mxu0 0
    %1147 = vmatpush1.bf16.msra.mxu0 0
    %1148 = vmatprep.subr.bf16.mxu0 0
    %1149 = vmatpush1.bf16.msra.mxu0 0
    %1150 = vmatprep.subr.bf16.mxu0 0
    %1151 = vmatpush1.bf16.msra.mxu0 0
    %1152 = vmatprep.subr.bf16.mxu0 0
    %1153 = vmatpush1.bf16.msra.mxu0 0
    %1154 = vmatprep.subr.bf16.mxu0 0
    %1155 = vmatpush1.bf16.msra.mxu0 0
    %1156 = vmatprep.mubr.bf16.mxu0 0
    %1157 = vmatmul.mubr.bf16.gmra.mrb[0].mxu0 %v1123
    %v1158 = vpop.f32.mrb[0].mxu0
    %v1159 = vadd.f32 0.0, %v1158
    %v1160 = vpop.f32.mrb[0].mxu0
    %v1161 = vadd.f32 0.0, %v1160
    %v1162 = vpop.f32.mrb[0].mxu0
    %v1163 = vpop.f32.mrb[0].mxu0
    %1164 = vdwg.mxu0
    %1165 = vmatprep.subr.bf16.mxu0 0
    %1166 = vmatpush1.bf16.msra.mxu0 %v448
    %1167 = vmatprep.subr.bf16.mxu0 0
    %1168 = vmatpush1.bf16.msra.mxu0 %v451
    %1169 = vmatprep.subr.bf16.mxu0 0
    %1170 = vmatpush1.bf16.msra.mxu0 %v454
    %1171 = vmatprep.subr.bf16.mxu0 0
    %1172 = vmatpush1.bf16.msra.mxu0 %v457
    %1173 = vmatprep.subr.bf16.mxu0 0
    %1174 = vmatpush1.bf16.msra.mxu0 %v460
    %1175 = vmatprep.subr.bf16.mxu0 0
    %1176 = vmatpush1.bf16.msra.mxu0 %v463
    %1177 = vmatprep.subr.bf16.mxu0 0
    %1178 = vmatpush1.bf16.msra.mxu0 %v466
    %1179 = vmatprep.subr.bf16.mxu0 0
    %1180 = vmatpush1.bf16.msra.mxu0 %v469
    %1181 = vmatprep.subr.bf16.mxu0 0
    %1182 = vmatpush1.bf16.msra.mxu0 0
    %1183 = vmatprep.subr.bf16.mxu0 0
    %1184 = vmatpush1.bf16.msra.mxu0 0
    %1185 = vmatprep.subr.bf16.mxu0 0
    %1186 = vmatpush1.bf16.msra.mxu0 0
    %1187 = vmatprep.subr.bf16.mxu0 0
    %1188 = vmatpush1.bf16.msra.mxu0 0
    %1189 = vmatprep.subr.bf16.mxu0 0
    %1190 = vmatpush1.bf16.msra.mxu0 0
    %1191 = vmatprep.subr.bf16.mxu0 0
    %1192 = vmatpush1.bf16.msra.mxu0 0
    %1193 = vmatprep.subr.bf16.mxu0 0
    %1194 = vmatpush1.bf16.msra.mxu0 0
    %1195 = vmatprep.subr.bf16.mxu0 0
    %1196 = vmatpush1.bf16.msra.mxu0 0
    %1197 = vmatprep.mubr.bf16.mxu0 0
    %1198 = vmatmul.mubr.bf16.gmra.mrb[0].mxu0 %v1123
    %v1199 = vpop.f32.mrb[0].mxu0
    %v1200 = vadd.f32 0.0, %v1199
    %v1201 = vpop.f32.mrb[0].mxu0
    %v1202 = vpop.f32.mrb[0].mxu0
    %v1203 = vpop.f32.mrb[0].mxu0
    %1204 = vdwg.mxu0
    %v1205 = vadd.f32 %v260, %v1159
    %v1206 = vxor.u32 %v1205, 2147483648
    %v1207 = vmul.f32 %v1206, 1.442695
    %v1208 = vpow.pop %v1207
    %v1209 = vadd.f32 %v1208, 1.0
    %v1210 = vrcp.pop %v1209
    %v1211 = vmul.f32 1.0, %v1210
    %v1212 = vadd.f32 %v262, %v1161
    %v1213 = vxor.u32 %v1212, 2147483648
    %v1214 = vmul.f32 %v1213, 1.442695
    %v1215 = vpow.pop %v1214
    %v1216 = vadd.f32 %v1215, 1.0
    %v1217 = vrcp.pop %v1216
    %v1218 = vmul.f32 1.0, %v1217
    %v1219 = vadd.f32 %v1200, %v593
    %v1220 = vmul.f32 %v1211, %v1219
    %v1221 = vadd.f32 %v327, %v1220
    %v1222 = vtanh.pop %v1221
    %v1223 = vsub.f32 1.0, %v1218
    %v1224 = vmul.f32 %v1223, %v1222
    %v1225 = vmul.f32 %v1218, %v1122
    %v1226 = vadd.f32 %v1224, %v1225
    %v1227 = vpack.c.bf16 %v1226, %v1226
    %1228 = vmatprep.subr.bf16.mxu0 %v447
    %1229 = vmatpush1.bf16.msra.mxu0 %v446
    %1230 = vmatprep.subr.bf16.mxu0 %v450
    %1231 = vmatpush1.bf16.msra.mxu0 %v449
    %1232 = vmatprep.subr.bf16.mxu0 %v453
    %1233 = vmatpush1.bf16.msra.mxu0 %v452
    %1234 = vmatprep.subr.bf16.mxu0 %v456
    %1235 = vmatpush1.bf16.msra.mxu0 %v455
    %1236 = vmatprep.subr.bf16.mxu0 %v459
    %1237 = vmatpush1.bf16.msra.mxu0 %v458
    %1238 = vmatprep.subr.bf16.mxu0 %v462
    %1239 = vmatpush1.bf16.msra.mxu0 %v461
    %1240 = vmatprep.subr.bf16.mxu0 %v465
    %1241 = vmatpush1.bf16.msra.mxu0 %v464
    %1242 = vmatprep.subr.bf16.mxu0 %v468
    %1243 = vmatpush1.bf16.msra.mxu0 %v467
    %1244 = vmatprep.subr.bf16.mxu0 0
    %1245 = vmatpush1.bf16.msra.mxu0 0
    %1246 = vmatprep.subr.bf16.mxu0 0
    %1247 = vmatpush1.bf16.msra.mxu0 0
    %1248 = vmatprep.subr.bf16.mxu0 0
    %1249 = vmatpush1.bf16.msra.mxu0 0
    %1250 = vmatprep.subr.bf16.mxu0 0
    %1251 = vmatpush1.bf16.msra.mxu0 0
    %1252 = vmatprep.subr.bf16.mxu0 0
    %1253 = vmatpush1.bf16.msra.mxu0 0
    %1254 = vmatprep.subr.bf16.mxu0 0
    %1255 = vmatpush1.bf16.msra.mxu0 0
    %1256 = vmatprep.subr.bf16.mxu0 0
    %1257 = vmatpush1.bf16.msra.mxu0 0
    %1258 = vmatprep.subr.bf16.mxu0 0
    %1259 = vmatpush1.bf16.msra.mxu0 0
    %1260 = vmatprep.mubr.bf16.mxu0 0
    %1261 = vmatmul.mubr.bf16.gmra.mrb[0].mxu0 %v1227
    %v1262 = vpop.f32.mrb[0].mxu0
    %v1263 = vadd.f32 0.0, %v1262
    %v1264 = vpop.f32.mrb[0].mxu0
    %v1265 = vadd.f32 0.0, %v1264
    %v1266 = vpop.f32.mrb[0].mxu0
    %v1267 = vpop.f32.mrb[0].mxu0
    %1268 = vdwg.mxu0
    %1269 = vmatprep.subr.bf16.mxu0 0
    %1270 = vmatpush1.bf16.msra.mxu0 %v448
    %1271 = vmatprep.subr.bf16.mxu0 0
    %1272 = vmatpush1.bf16.msra.mxu0 %v451
    %1273 = vmatprep.subr.bf16.mxu0 0
    %1274 = vmatpush1.bf16.msra.mxu0 %v454
    %1275 = vmatprep.subr.bf16.mxu0 0
    %1276 = vmatpush1.bf16.msra.mxu0 %v457
    %1277 = vmatprep.subr.bf16.mxu0 0
    %1278 = vmatpush1.bf16.msra.mxu0 %v460
    %1279 = vmatprep.subr.bf16.mxu0 0
    %1280 = vmatpush1.bf16.msra.mxu0 %v463
    %1281 = vmatprep.subr.bf16.mxu0 0
    %1282 = vmatpush1.bf16.msra.mxu0 %v466
    %1283 = vmatprep.subr.bf16.mxu0 0
    %1284 = vmatpush1.bf16.msra.mxu0 %v469
    %1285 = vmatprep.subr.bf16.mxu0 0
    %1286 = vmatpush1.bf16.msra.mxu0 0
    %1287 = vmatprep.subr.bf16.mxu0 0
    %1288 = vmatpush1.bf16.msra.mxu0 0
    %1289 = vmatprep.subr.bf16.mxu0 0
    %1290 = vmatpush1.bf16.msra.mxu0 0
    %1291 = vmatprep.subr.bf16.mxu0 0
    %1292 = vmatpush1.bf16.msra.mxu0 0
    %1293 = vmatprep.subr.bf16.mxu0 0
    %1294 = vmatpush1.bf16.msra.mxu0 0
    %1295 = vmatprep.subr.bf16.mxu0 0
    %1296 = vmatpush1.bf16.msra.mxu0 0
    %1297 = vmatprep.subr.bf16.mxu0 0
    %1298 = vmatpush1.bf16.msra.mxu0 0
    %1299 = vmatprep.subr.bf16.mxu0 0
    %1300 = vmatpush1.bf16.msra.mxu0 0
    %1301 = vmatprep.mubr.bf16.mxu0 0
    %1302 = vmatmul.mubr.bf16.gmra.mrb[0].mxu0 %v1227
    %v1303 = vpop.f32.mrb[0].mxu0
    %v1304 = vadd.f32 0.0, %v1303
    %v1305 = vpop.f32.mrb[0].mxu0
    %v1306 = vpop.f32.mrb[0].mxu0
    %v1307 = vpop.f32.mrb[0].mxu0
    %1308 = vdwg.mxu0
    %v1309 = vadd.f32 %v264, %v1263
    %v1310 = vxor.u32 %v1309, 2147483648
    %v1311 = vmul.f32 %v1310, 1.442695
    %v1312 = vpow.pop %v1311
    %v1313 = vadd.f32 %v1312, 1.0
    %v1314 = vrcp.pop %v1313
    %v1315 = vmul.f32 1.0, %v1314
    %v1316 = vadd.f32 %v266, %v1265
    %v1317 = vxor.u32 %v1316, 2147483648
    %v1318 = vmul.f32 %v1317, 1.442695
    %v1319 = vpow.pop %v1318
    %v1320 = vadd.f32 %v1319, 1.0
    %v1321 = vrcp.pop %v1320
    %v1322 = vmul.f32 1.0, %v1321
    %v1323 = vadd.f32 %v1304, %v593
    %v1324 = vmul.f32 %v1315, %v1323
    %v1325 = vadd.f32 %v330, %v1324
    %v1326 = vtanh.pop %v1325
    %v1327 = vsub.f32 1.0, %v1322
    %v1328 = vmul.f32 %v1327, %v1326
    %v1329 = vmul.f32 %v1322, %v1226
    %v1330 = vadd.f32 %v1328, %v1329
    %v1331 = vpack.c.bf16 %v1330, %v1330
    %v1332 = vld [vmem:[#allocation4] sm:$0xff]
    %v1333 = vld [vmem:[#allocation4 + $0x8] sm:$0xff]
    %v1334 = vld [vmem:[#allocation4 + $0x10] sm:$0xff]
    %v1335 = vld [vmem:[#allocation4 + $0x18] sm:$0xff]
    %v1336 = vld [vmem:[#allocation4 + $0x20] sm:$0xff]
    %v1337 = vld [vmem:[#allocation4 + $0x28] sm:$0xff]
    %v1338 = vld [vmem:[#allocation4 + $0x30] sm:$0xff]
    %v1339 = vld [vmem:[#allocation4 + $0x38] sm:$0xff]
    %v1340 = vld [vmem:[#allocation4 + $0x40] sm:$0xff]
    %v1341 = vld [vmem:[#allocation4 + $0x48] sm:$0xff]
    %v1342 = vld [vmem:[#allocation4 + $0x50] sm:$0xff]
    %v1343 = vld [vmem:[#allocation4 + $0x58] sm:$0xff]
    %v1344 = vld [vmem:[#allocation4 + $0x60] sm:$0xff]
    %v1345 = vld [vmem:[#allocation4 + $0x68] sm:$0xff]
    %v1346 = vld [vmem:[#allocation4 + $0x70] sm:$0xff]
    %v1347 = vld [vmem:[#allocation4 + $0x78] sm:$0xff]
    %v1348 = vld [vmem:[%s7] sm:$0x3]
    %v1350 = vlaneseq
    %v1351 = vshrl.u32 %v1350, 7
    %v1352 = vsub.s32 0, %v1351
    %v1353 = vrot.slane %v1348, %v1352
    %v1354 = vlaneseq
    %v1355 = vshrl.u32 %v1354, 7
    %v1356 = vsub.s32 1, %v1355
    %v1357 = vrot.slane %v1348, %v1356
    %v1376 = vunpack.c.l.b16 %v1332
    %v1377 = vunpack.c.h.b16 %v1332
    %v1378 = vunpack.c.l.b16 %v1333
    %v1379 = vunpack.c.h.b16 %v1333
    %v1380 = vunpack.c.l.b16 %v1334
    %v1381 = vunpack.c.h.b16 %v1334
    %v1382 = vunpack.c.l.b16 %v1335
    %v1383 = vunpack.c.h.b16 %v1335
    %v1384 = vunpack.c.l.b16 %v1336
    %v1385 = vunpack.c.h.b16 %v1336
    %v1386 = vunpack.c.l.b16 %v1337
    %v1387 = vunpack.c.h.b16 %v1337
    %v1388 = vunpack.c.l.b16 %v1338
    %v1389 = vunpack.c.h.b16 %v1338
    %v1390 = vunpack.c.l.b16 %v1339
    %v1391 = vunpack.c.h.b16 %v1339
    %v1392 = vunpack.c.l.b16 %v1340
    %v1393 = vunpack.c.h.b16 %v1340
    %v1394 = vunpack.c.l.b16 %v1341
    %v1395 = vunpack.c.h.b16 %v1341
    %v1396 = vunpack.c.l.b16 %v1342
    %v1397 = vunpack.c.h.b16 %v1342
    %v1398 = vunpack.c.l.b16 %v1343
    %v1399 = vunpack.c.h.b16 %v1343
    %v1400 = vunpack.c.l.b16 %v1344
    %v1401 = vunpack.c.h.b16 %v1344
    %v1402 = vunpack.c.l.b16 %v1345
    %v1403 = vunpack.c.h.b16 %v1345
    %v1404 = vunpack.c.l.b16 %v1346
    %v1405 = vunpack.c.h.b16 %v1346
    %v1406 = vunpack.c.l.b16 %v1347
    %v1407 = vunpack.c.h.b16 %v1347
    %v1408 = vpack.c.b16 %v1378, %v1376
    %v1409 = vpack.c.b16 %v1379, %v1377
    %v1410 = vpack.c.b16 %v1382, %v1380
    %v1411 = vpack.c.b16 %v1383, %v1381
    %v1412 = vpack.c.b16 %v1386, %v1384
    %v1413 = vpack.c.b16 %v1387, %v1385
    %v1414 = vpack.c.b16 %v1390, %v1388
    %v1415 = vpack.c.b16 %v1391, %v1389
    %v1416 = vpack.c.b16 %v1394, %v1392
    %v1417 = vpack.c.b16 %v1395, %v1393
    %v1418 = vpack.c.b16 %v1398, %v1396
    %v1419 = vpack.c.b16 %v1399, %v1397
    %v1420 = vpack.c.b16 %v1402, %v1400
    %v1421 = vpack.c.b16 %v1403, %v1401
    %v1422 = vpack.c.b16 %v1406, %v1404
    %v1423 = vpack.c.b16 %v1407, %v1405
    %1440 = vmatprep.subr.bf16.mxu0 %v1409
    %1441 = vmatpush1.bf16.msra.mxu0 %v1408
    %1442 = vmatprep.subr.bf16.mxu0 %v1411
    %1443 = vmatpush1.bf16.msra.mxu0 %v1410
    %1444 = vmatprep.subr.bf16.mxu0 %v1413
    %1445 = vmatpush1.bf16.msra.mxu0 %v1412
    %1446 = vmatprep.subr.bf16.mxu0 %v1415
    %1447 = vmatpush1.bf16.msra.mxu0 %v1414
    %1448 = vmatprep.subr.bf16.mxu0 %v1417
    %1449 = vmatpush1.bf16.msra.mxu0 %v1416
    %1450 = vmatprep.subr.bf16.mxu0 %v1419
    %1451 = vmatpush1.bf16.msra.mxu0 %v1418
    %1452 = vmatprep.subr.bf16.mxu0 %v1421
    %1453 = vmatpush1.bf16.msra.mxu0 %v1420
    %1454 = vmatprep.subr.bf16.mxu0 %v1423
    %1455 = vmatpush1.bf16.msra.mxu0 %v1422
    %1456 = vmatprep.subr.bf16.mxu0 0
    %1457 = vmatpush1.bf16.msra.mxu0 0
    %1458 = vmatprep.subr.bf16.mxu0 0
    %1459 = vmatpush1.bf16.msra.mxu0 0
    %1460 = vmatprep.subr.bf16.mxu0 0
    %1461 = vmatpush1.bf16.msra.mxu0 0
    %1462 = vmatprep.subr.bf16.mxu0 0
    %1463 = vmatpush1.bf16.msra.mxu0 0
    %1464 = vmatprep.subr.bf16.mxu0 0
    %1465 = vmatpush1.bf16.msra.mxu0 0
    %1466 = vmatprep.subr.bf16.mxu0 0
    %1467 = vmatpush1.bf16.msra.mxu0 0
    %1468 = vmatprep.subr.bf16.mxu0 0
    %1469 = vmatpush1.bf16.msra.mxu0 0
    %1470 = vmatprep.subr.bf16.mxu0 0
    %1471 = vmatpush1.bf16.msra.mxu0 0
    %1472 = vmatprep.mubr.bf16.mxu0 0
    %1473 = vmatmul.mubr.bf16.gmra.mrb[0].mxu0 %v1331
    %v1474 = vpop.f32.mrb[0].mxu0
    %v1475 = vadd.f32 %v1353, %v1474
    %v1476 = vpop.f32.mrb[0].mxu0
    %v1477 = vadd.f32 %v1357, %v1476
    %v1478 = vpop.f32.mrb[0].mxu0
    %v1479 = vpop.f32.mrb[0].mxu0
    %1480 = vdwg.mxu0
    %v1481 = vtanh.pop %v1475
    %v1482 = vtanh.pop %v1477
    %v1483 = vpack.c.bf16 %v1481, %v1481
    %v1484 = vpack.c.bf16 %v1482, %v1482
    %v1485 = vld [vmem:[#allocation6] sm:$0xf]
    %v1486 = vld [vmem:[#allocation6 + $0x4] sm:$0xf]
    %v1487 = vld [vmem:[#allocation6 + $0x8] sm:$0xf]
    %v1488 = vld [vmem:[#allocation6 + $0xc] sm:$0xf]
    %v1489 = vld [vmem:[#allocation6 + $0x10] sm:$0xf]
    %v1490 = vld [vmem:[#allocation6 + $0x14] sm:$0xf]
    %v1491 = vld [vmem:[#allocation6 + $0x18] sm:$0xf]
    %v1492 = vld [vmem:[#allocation6 + $0x1c] sm:$0xf]
    %v1493 = vld [vmem:[#allocation6 + $0x20] sm:$0xf]
    %v1494 = vld [vmem:[#allocation6 + $0x24] sm:$0xf]
    %v1495 = vld [vmem:[#allocation6 + $0x28] sm:$0xf]
    %v1496 = vld [vmem:[#allocation6 + $0x2c] sm:$0xf]
    %v1497 = vld [vmem:[#allocation6 + $0x30] sm:$0xf]
    %v1498 = vld [vmem:[#allocation6 + $0x34] sm:$0xf]
    %v1499 = vld [vmem:[#allocation6 + $0x38] sm:$0xf]
    %v1500 = vld [vmem:[#allocation6 + $0x3c] sm:$0xf]
    %v1501 = vld [vmem:[#allocation6 + $0x40] sm:$0xf]
    %v1502 = vld [vmem:[#allocation6 + $0x44] sm:$0xf]
    %v1503 = vld [vmem:[#allocation6 + $0x48] sm:$0xf]
    %v1504 = vld [vmem:[#allocation6 + $0x4c] sm:$0xf]
    %v1505 = vld [vmem:[#allocation6 + $0x50] sm:$0xf]
    %v1506 = vld [vmem:[#allocation6 + $0x54] sm:$0xf]
    %v1507 = vld [vmem:[#allocation6 + $0x58] sm:$0xf]
    %v1508 = vld [vmem:[#allocation6 + $0x5c] sm:$0xf]
    %v1509 = vld [vmem:[#allocation6 + $0x60] sm:$0xf]
    %v1510 = vld [vmem:[#allocation6 + $0x64] sm:$0xf]
    %v1511 = vld [vmem:[#allocation6 + $0x68] sm:$0xf]
    %v1512 = vld [vmem:[#allocation6 + $0x6c] sm:$0xf]
    %v1513 = vld [vmem:[#allocation6 + $0x70] sm:$0xf]
    %v1514 = vld [vmem:[#allocation6 + $0x74] sm:$0xf]
    %v1515 = vld [vmem:[#allocation6 + $0x78] sm:$0xf]
    %v1516 = vld [vmem:[#allocation6 + $0x7c] sm:$0xf]
    %v1517 = vld [vmem:[%s9] sm:$0x1]
    %v1519 = vlaneseq
    %v1520 = vshrl.u32 %v1519, 7
    %v1521 = vsub.s32 0, %v1520
    %v1522 = vrot.slane %v1517, %v1521
    %v1556 = vunpack.c.l.b16 %v1485
    %v1557 = vunpack.c.l.b16 %v1486
    %v1558 = vunpack.c.l.b16 %v1487
    %v1559 = vunpack.c.l.b16 %v1488
    %v1560 = vunpack.c.l.b16 %v1489
    %v1561 = vunpack.c.l.b16 %v1490
    %v1562 = vunpack.c.l.b16 %v1491
    %v1563 = vunpack.c.l.b16 %v1492
    %v1564 = vunpack.c.l.b16 %v1493
    %v1565 = vunpack.c.l.b16 %v1494
    %v1566 = vunpack.c.l.b16 %v1495
    %v1567 = vunpack.c.l.b16 %v1496
    %v1568 = vunpack.c.l.b16 %v1497
    %v1569 = vunpack.c.l.b16 %v1498
    %v1570 = vunpack.c.l.b16 %v1499
    %v1571 = vunpack.c.l.b16 %v1500
    %v1572 = vunpack.c.l.b16 %v1501
    %v1573 = vunpack.c.l.b16 %v1502
    %v1574 = vunpack.c.l.b16 %v1503
    %v1575 = vunpack.c.l.b16 %v1504
    %v1576 = vunpack.c.l.b16 %v1505
    %v1577 = vunpack.c.l.b16 %v1506
    %v1578 = vunpack.c.l.b16 %v1507
    %v1579 = vunpack.c.l.b16 %v1508
    %v1580 = vunpack.c.l.b16 %v1509
    %v1581 = vunpack.c.l.b16 %v1510
    %v1582 = vunpack.c.l.b16 %v1511
    %v1583 = vunpack.c.l.b16 %v1512
    %v1584 = vunpack.c.l.b16 %v1513
    %v1585 = vunpack.c.l.b16 %v1514
    %v1586 = vunpack.c.l.b16 %v1515
    %v1587 = vunpack.c.l.b16 %v1516
    %v1588 = vpack.c.b16 %v1557, %v1556
    %v1589 = vpack.c.b16 %v1559, %v1558
    %v1590 = vpack.c.b16 %v1561, %v1560
    %v1591 = vpack.c.b16 %v1563, %v1562
    %v1592 = vpack.c.b16 %v1565, %v1564
    %v1593 = vpack.c.b16 %v1567, %v1566
    %v1594 = vpack.c.b16 %v1569, %v1568
    %v1595 = vpack.c.b16 %v1571, %v1570
    %v1596 = vpack.c.b16 %v1573, %v1572
    %v1597 = vpack.c.b16 %v1575, %v1574
    %v1598 = vpack.c.b16 %v1577, %v1576
    %v1599 = vpack.c.b16 %v1579, %v1578
    %v1600 = vpack.c.b16 %v1581, %v1580
    %v1601 = vpack.c.b16 %v1583, %v1582
    %v1602 = vpack.c.b16 %v1585, %v1584
    %v1603 = vpack.c.b16 %v1587, %v1586
    %1620 = vmatprep.subr.bf16.mxu0 0
    %1621 = vmatpush1.bf16.msra.mxu0 %v1588
    %1622 = vmatprep.subr.bf16.mxu0 0
    %1623 = vmatpush1.bf16.msra.mxu0 %v1589
    %1624 = vmatprep.subr.bf16.mxu0 0
    %1625 = vmatpush1.bf16.msra.mxu0 %v1590
    %1626 = vmatprep.subr.bf16.mxu0 0
    %1627 = vmatpush1.bf16.msra.mxu0 %v1591
    %1628 = vmatprep.subr.bf16.mxu0 0
    %1629 = vmatpush1.bf16.msra.mxu0 %v1592
    %1630 = vmatprep.subr.bf16.mxu0 0
    %1631 = vmatpush1.bf16.msra.mxu0 %v1593
    %1632 = vmatprep.subr.bf16.mxu0 0
    %1633 = vmatpush1.bf16.msra.mxu0 %v1594
    %1634 = vmatprep.subr.bf16.mxu0 0
    %1635 = vmatpush1.bf16.msra.mxu0 %v1595
    %1636 = vmatprep.subr.bf16.mxu0 0
    %1637 = vmatpush1.bf16.msra.mxu0 %v1596
    %1638 = vmatprep.subr.bf16.mxu0 0
    %1639 = vmatpush1.bf16.msra.mxu0 %v1597
    %1640 = vmatprep.subr.bf16.mxu0 0
    %1641 = vmatpush1.bf16.msra.mxu0 %v1598
    %1642 = vmatprep.subr.bf16.mxu0 0
    %1643 = vmatpush1.bf16.msra.mxu0 %v1599
    %1644 = vmatprep.subr.bf16.mxu0 0
    %1645 = vmatpush1.bf16.msra.mxu0 %v1600
    %1646 = vmatprep.subr.bf16.mxu0 0
    %1647 = vmatpush1.bf16.msra.mxu0 %v1601
    %1648 = vmatprep.subr.bf16.mxu0 0
    %1649 = vmatpush1.bf16.msra.mxu0 %v1602
    %1650 = vmatprep.subr.bf16.mxu0 0
    %1651 = vmatpush1.bf16.msra.mxu0 %v1603
    %1652 = vmatprep.mubr.bf16.mxu0 %v1484
    %1653 = vmatmul.mubr.bf16.gmra.mrb[0].mxu0 %v1483
    %v1654 = vpop.f32.mrb[0].mxu0
    %v1655 = vadd.f32 %v1522, %v1654
    %v1656 = vpop.f32.mrb[0].mxu0
    %v1657 = vpop.f32.mrb[0].mxu0
    %v1658 = vpop.f32.mrb[0].mxu0
    %1659 = vdwg.mxu0
    %v1660 = vtanh.pop %v1655
    %v1661 = vpack.c.bf16 %v1660, %v1660
    %v1662 = vld [vmem:[#allocation7] sm:$0xf]
    %v1663 = vld [vmem:[#allocation7 + $0x4] sm:$0xf]
    %v1664 = vld [vmem:[#allocation7 + $0x8] sm:$0xf]
    %v1665 = vld [vmem:[#allocation7 + $0xc] sm:$0xf]
    %v1666 = vld [vmem:[#allocation7 + $0x10] sm:$0xf]
    %v1667 = vld [vmem:[#allocation7 + $0x14] sm:$0xf]
    %v1668 = vld [vmem:[#allocation7 + $0x18] sm:$0xf]
    %v1669 = vld [vmem:[#allocation7 + $0x1c] sm:$0xf]
    %v1670 = vld [vmem:[#allocation7 + $0x20] sm:$0xf]
    %v1671 = vld [vmem:[#allocation7 + $0x24] sm:$0xf]
    %v1672 = vld [vmem:[#allocation7 + $0x28] sm:$0xf]
    %v1673 = vld [vmem:[#allocation7 + $0x2c] sm:$0xf]
    %v1674 = vld [vmem:[#allocation7 + $0x30] sm:$0xf]
    %v1675 = vld [vmem:[#allocation7 + $0x34] sm:$0xf]
    %v1676 = vld [vmem:[#allocation7 + $0x38] sm:$0xf]
    %v1677 = vld [vmem:[#allocation7 + $0x3c] sm:$0xf]
    %v1678 = vld [vmem:[%s11] sm:$0x1]
    %v1680 = vlaneseq
    %v1681 = vshrl.u32 %v1680, 7
    %v1682 = vsub.s32 0, %v1681
    %v1683 = vrot.slane %v1678, %v1682
    %v1701 = vunpack.c.l.b16 %v1662
    %v1702 = vunpack.c.l.b16 %v1663
    %v1703 = vunpack.c.l.b16 %v1664
    %v1704 = vunpack.c.l.b16 %v1665
    %v1705 = vunpack.c.l.b16 %v1666
    %v1706 = vunpack.c.l.b16 %v1667
    %v1707 = vunpack.c.l.b16 %v1668
    %v1708 = vunpack.c.l.b16 %v1669
    %v1709 = vunpack.c.l.b16 %v1670
    %v1710 = vunpack.c.l.b16 %v1671
    %v1711 = vunpack.c.l.b16 %v1672
    %v1712 = vunpack.c.l.b16 %v1673
    %v1713 = vunpack.c.l.b16 %v1674
    %v1714 = vunpack.c.l.b16 %v1675
    %v1715 = vunpack.c.l.b16 %v1676
    %v1716 = vunpack.c.l.b16 %v1677
    %v1717 = vpack.c.b16 %v1702, %v1701
    %v1718 = vpack.c.b16 %v1704, %v1703
    %v1719 = vpack.c.b16 %v1706, %v1705
    %v1720 = vpack.c.b16 %v1708, %v1707
    %v1721 = vpack.c.b16 %v1710, %v1709
    %v1722 = vpack.c.b16 %v1712, %v1711
    %v1723 = vpack.c.b16 %v1714, %v1713
    %v1724 = vpack.c.b16 %v1716, %v1715
    %1733 = vmatprep.subr.bf16.mxu0 0
    %1734 = vmatpush1.bf16.msra.mxu0 %v1717
    %1735 = vmatprep.subr.bf16.mxu0 0
    %1736 = vmatpush1.bf16.msra.mxu0 %v1718
    %1737 = vmatprep.subr.bf16.mxu0 0
    %1738 = vmatpush1.bf16.msra.mxu0 %v1719
    %1739 = vmatprep.subr.bf16.mxu0 0
    %1740 = vmatpush1.bf16.msra.mxu0 %v1720
    %1741 = vmatprep.subr.bf16.mxu0 0
    %1742 = vmatpush1.bf16.msra.mxu0 %v1721
    %1743 = vmatprep.subr.bf16.mxu0 0
    %1744 = vmatpush1.bf16.msra.mxu0 %v1722
    %1745 = vmatprep.subr.bf16.mxu0 0
    %1746 = vmatpush1.bf16.msra.mxu0 %v1723
    %1747 = vmatprep.subr.bf16.mxu0 0
    %1748 = vmatpush1.bf16.msra.mxu0 %v1724
    %1749 = vmatprep.subr.bf16.mxu0 0
    %1750 = vmatpush1.bf16.msra.mxu0 0
    %1751 = vmatprep.subr.bf16.mxu0 0
    %1752 = vmatpush1.bf16.msra.mxu0 0
    %1753 = vmatprep.subr.bf16.mxu0 0
    %1754 = vmatpush1.bf16.msra.mxu0 0
    %1755 = vmatprep.subr.bf16.mxu0 0
    %1756 = vmatpush1.bf16.msra.mxu0 0
    %1757 = vmatprep.subr.bf16.mxu0 0
    %1758 = vmatpush1.bf16.msra.mxu0 0
    %1759 = vmatprep.subr.bf16.mxu0 0
    %1760 = vmatpush1.bf16.msra.mxu0 0
    %1761 = vmatprep.subr.bf16.mxu0 0
    %1762 = vmatpush1.bf16.msra.mxu0 0
    %1763 = vmatprep.subr.bf16.mxu0 0
    %1764 = vmatpush1.bf16.msra.mxu0 0
    %1765 = vmatprep.mubr.bf16.mxu0 0
    %1766 = vmatmul.mubr.bf16.gmra.mrb[0].mxu0 %v1661
    %v1767 = vpop.f32.mrb[0].mxu0
    %v1768 = vadd.f32 %v1683, %v1767
    %v1769 = vpop.f32.mrb[0].mxu0
    %v1770 = vpop.f32.mrb[0].mxu0
    %v1771 = vpop.f32.mrb[0].mxu0
    %1772 = vdwg.mxu0
    %1773 = vst [vmem:[%s12] sm:$0xff] %v1768
    %v1774 = vld [vmem:[%s1] sm:$0xff]
    %v1775 = vmul.f32 %v1768, %v1774
    %1777 = vrot.lane.b32.xlu0 %v1768, 64
    %v1778 = vpop.permute.xlu0 %1777
    %v1780 = vadd.f32 %v1775, %v1778
    %vm1781 = vcmask 523264
    %1782 = vst.msk [vmem:[%s12 + $0x8] sm:$0xff] %vm1781, %v1780
    // Predicated region
    $region66: #{nfdiag_forward.1} parent=1 // pred_check
      _
    $region67: #{nfdiag_forward.1} parent=1 // pred_check_branch
      %1784 = sbr.rel (0) target = $region69
    $region68: #{nfdiag_forward.1} parent=1 // pred_region
      _
    $region69: #{nfdiag_forward.1} parent=1 // pred_fallthru
      _
    // Predicated region
    $region70: #{nfdiag_forward.1} parent=1 // pred_check
      _
    $region71: #{nfdiag_forward.1} parent=1 // pred_check_branch
      %1786 = sbr.rel (0) target = $region73
    $region72: #{nfdiag_forward.1} parent=1 // pred_region
      _
    $region73: #{nfdiag_forward.1} parent=1 // pred_fallthru
      _
    %1787 = vsyncpa [#allocation3], 1
    %1788 = vsyncpa [#allocation5], 1
    %1789 = vsyncpa [#allocation8], 1

</llo_original>
